<compile_context>
chip_gen: v7x
topology: tpu7x:2x2x1
jax: 0.10.0
libtpu: 0.0.40
codegen_flags: <defaults>
</compile_context>

<pallas_src>
import jax
import jax.numpy as jnp
import numpy as np
from jax.experimental import pallas as pl
from jax.experimental.pallas import tpu as pltpu

BN_EPS = 1e-5


# ---------------------------------------------------------------------------
# Fused Pallas kernel: conv1+BN1+ReLU -> (VMEM scratch) -> conv2+BN2+ReLU
# ---------------------------------------------------------------------------
def _make_fused_kernel(N, HO1, WO1, WO1P, C1, HO2, WO2):
    M1 = N * HO1 * WO1P          # stage-1 rows, incl. zero-padded width columns
    M2 = N * HO2 * WO2           # stage-2 rows (all valid)
    n_valid1 = N * HO1 * WO1     # rows that carry real conv1 outputs
    inv_n1 = 1.0 / float(n_valid1)
    inv_n2 = 1.0 / float(M2)

    def kernel(p1_ref, w1_ref, w2_ref, gb_ref, o_ref, y1_ref):
        # ---------------- stage 1: conv1 as one im2col matmul (K padded 27->32) ----
        acc1 = jnp.dot(p1_ref[...], w1_ref[...],
                       preferred_element_type=jnp.float32)            # [M1, C1]

        # BatchNorm2d (training-mode, biased) as a single sum/sumsq pass.
        # Padded width rows of acc1 are exactly zero (they only ever see zero
        # padding), so they contribute nothing to sum or sumsq -> no mask needed.
        mean1 = jnp.sum(acc1, axis=0, keepdims=True) * inv_n1          # [1, C1]
        ex2_1 = jnp.sum(acc1 * acc1, axis=0, keepdims=True) * inv_n1   # E[x^2]
        var1 = ex2_1 - mean1 * mean1
        scale1 = gb_ref[0:1, :] * jax.lax.rsqrt(var1 + BN_EPS)
        shift1 = gb_ref[1:2, :] - mean1 * scale1
        h1 = jnp.maximum(acc1 * scale1 + shift1, 0.0)                  # fused BN+ReLU

        # Keep the activation resident in VMEM for stage 2 (tile-aligned reshape:
        # trailing dim unchanged, WO1P is a multiple of 8).
        y1_ref[...] = h1.reshape(N, HO1, WO1P, C1)

        # ---------------- stage 2: conv2 as 3 K=96 matmuls over the scratch --------
        # Per ky, the three kx taps are concatenated along the reduction dim so a
        # single [M2,96]x[96,32] matmul replaces three K=32 matmuls.  The slices
        # only touch w in [kx, kx+WO2) <= WO1-1, so stage-1 pad columns are never
        # read.  acc2 is seeded by the first tap (no zeros + add).
        acc2 = None
        for ky in range(3):
            lhs = jnp.concatenate(
                [y1_ref[:, ky:ky + HO2, kx:kx + WO2, :].reshape(M2, C1)
                 for kx in range(3)],
                axis=-1)                                               # [M2, 3*C1]
            d = jnp.dot(lhs, w2_ref[ky], preferred_element_type=jnp.float32)
            acc2 = d if acc2 is None else acc2 + d                     # [M2, C1]

        # BatchNorm2d (training-mode) over all M2 rows (all valid) + ReLU, fused.
        mean2 = jnp.sum(acc2, axis=0, keepdims=True) * inv_n2
        ex2_2 = jnp.sum(acc2 * acc2, axis=0, keepdims=True) * inv_n2
        var2 = ex2_2 - mean2 * mean2
        scale2 = gb_ref[2:3, :] * jax.lax.rsqrt(var2 + BN_EPS)
        shift2 = gb_ref[3:4, :] - mean2 * scale2
        o_ref[...] = jnp.maximum(acc2 * scale2 + shift2, 0.0)

    return kernel


# ---------------------------------------------------------------------------
# JAX glue: parameter init + wrapper (layout prep happens once, fuses in XLA)
# ---------------------------------------------------------------------------
def init_params(key):
    inplanes, planes, expansion = 3, 32, 1
    k1, k2 = jax.random.split(key)
    return {
        "conv1_w": 0.1 * jax.random.normal(k1, (planes, inplanes, 3, 3), jnp.float32),
        "bn1_gamma": jnp.ones((planes,), jnp.float32),
        "bn1_beta": jnp.zeros((planes,), jnp.float32),
        "conv2_w": 0.1 * jax.random.normal(k2, (planes * expansion, planes, 3, 3), jnp.float32),
        "bn2_gamma": jnp.ones((planes,), jnp.float32),
        "bn2_beta": jnp.zeros((planes,), jnp.float32),
    }


def image_encoder_forward(params, x_nchw):
    N, Cin, Hi, Wi = x_nchw.shape
    C1 = params["conv1_w"].shape[0]

    # Geometry: conv1 k3/pad2 -> HO1=Hi+2; conv2 k3/pad0 -> HO2=HO1-2.
    HO1, WO1 = Hi + 2, Wi + 2
    WO1P = max(8, pl.next_power_of_2(WO1))      # pad width so reshapes are tile-aligned
    HO2, WO2 = HO1 - 2, WO1 - 2
    K1 = 9 * Cin
    K1P = ((K1 + 7) // 8) * 8                   # pad reduction dim 27 -> 32
    M2 = N * HO2 * WO2

    # Alignment requirements for the in-kernel reshapes (hold for the 8x8 board).
    assert WO1P % 8 == 0 and (WO1P & (WO1P - 1)) == 0
    assert WO2 % 8 == 0

    # ---- input prep: NCHW -> NHWC, spatial pad, stage-1 im2col (single XLA fusion)
    x = jnp.transpose(x_nchw, (0, 2, 3, 1))
    x_p = jnp.pad(x, ((0, 0), (2, 2), (2, 2 + WO1P - WO1), (0, 0)))
    cols = [x_p[:, ky:ky + HO1, kx:kx + WO1P, :]
            for ky in range(3) for kx in range(3)]
    p1 = jnp.stack(cols, axis=3).reshape(N * HO1 * WO1P, K1)
    p1 = jnp.pad(p1, ((0, 0), (0, K1P - K1)))                     # [M1, K1P]

    # ---- weight / BN-param prep
    w1_mat = jnp.transpose(params["conv1_w"], (2, 3, 1, 0)).reshape(K1, C1)
    w1_mat = jnp.pad(w1_mat, ((0, K1P - K1), (0, 0)))             # [K1P, C1]
    # conv2 weights packed per-ky with K = (kx, ci) so one K=96 matmul covers 3 taps.
    w2_k = jnp.transpose(params["conv2_w"], (2, 3, 1, 0)).reshape(3, 3 * C1, C1)
    gb = jnp.stack([params["bn1_gamma"], params["bn1_beta"],
                    params["bn2_gamma"], params["bn2_beta"]], axis=0)  # [4, C1]

    kernel = _make_fused_kernel(N, HO1, WO1, WO1P, C1, HO2, WO2)

    flops = 2 * (N * HO1 * WO1P) * K1P * C1 + 2 * 3 * M2 * (3 * C1) * C1
    bytes_accessed = 4 * (p1.size + w1_mat.size + w2_k.size + gb.size + M2 * C1)

    # NOTE(scaling): at production batch sizes, add a grid over N/M with
    # dimension_semantics=("parallel", ...) so both v7x TensorCores are used and
    # BlockSpec double-buffering overlaps the input DMAs; switch BN to a two-pass
    # (sum/sumsq then normalize) reduction across row-blocks; re-derive the block
    # size for v7x's 64 MiB VMEM (the 32-channel scratch is lane-padded 4x); and
    # consider bf16 matmul operands on v6e/v7x.  Not worth it at N=2 / 8x8.
    out2d = pl.pallas_call(
        kernel,
        out_shape=jax.ShapeDtypeStruct((M2, C1), jnp.float32),
        in_specs=[pl.BlockSpec(memory_space=pltpu.MemorySpace.VMEM)] * 4,
        out_specs=pl.BlockSpec(memory_space=pltpu.MemorySpace.VMEM),
        scratch_shapes=[pltpu.VMEM((N, HO1, WO1P, C1), jnp.float32)],
        cost_estimate=pl.CostEstimate(
            flops=flops, transcendentals=2 * C1, bytes_accessed=bytes_accessed),
    )(p1, w1_mat, w2_k, gb)

    out = out2d.reshape(N, HO2, WO2, C1)
    return jnp.transpose(out, (0, 3, 1, 2))     # NHWC -> NCHW


# ---------------------------------------------------------------------------
# Pure-JAX reference (for correctness check)
# ---------------------------------------------------------------------------
def _reference(params, x_nchw):
    def conv(x, w, pad):
        return jax.lax.conv_general_dilated(
            x, w, window_strides=(1, 1), padding=((pad, pad), (pad, pad)),
            dimension_numbers=("NCHW", "OIHW", "NCHW"))

    def bn(x, g, b):
        mean = jnp.mean(x, axis=(0, 2, 3), keepdims=True)
        var = jnp.mean((x - mean) ** 2, axis=(0, 2, 3), keepdims=True)
        xhat = (x - mean) * jax.lax.rsqrt(var + BN_EPS)
        return g[None, :, None, None] * xhat + b[None, :, None, None]

    h = jax.nn.relu(bn(conv(x_nchw, params["conv1_w"], 2),
                       params["bn1_gamma"], params["bn1_beta"]))
    return jax.nn.relu(bn(conv(h, params["conv2_w"], 0),
                          params["bn2_gamma"], params["bn2_beta"]))


if __name__ == "__main__":
    key = jax.random.PRNGKey(0)
    pkey, xkey = jax.random.split(key)
    params = init_params(pkey)

    # Input consistent with the module: conv1 expects 3 input channels, 8x8 board.
    x = jax.random.normal(xkey, (2, 3, 8, 8), jnp.float32)

    out = jax.jit(image_encoder_forward)(params, x)
    out = jax.block_until_ready(out)

    assert out.shape == (2, 32, 8, 8), out.shape
    ref = _reference(params, x)
    np.testing.assert_allclose(np.asarray(out), np.asarray(ref), rtol=1e-3, atol=1e-3)

    print("KERNEL_OK")
</pallas_src>

<mosaic_0001>
module attributes {stable_mosaic.version = 11 : i64} {
  func.func @kernel(%arg0: memref<320x32xf32, #tpu.memory_space<vmem>>, %arg1: memref<32x32xf32, #tpu.memory_space<vmem>>, %arg2: memref<3x96x32xf32, #tpu.memory_space<vmem>>, %arg3: memref<4x32xf32, #tpu.memory_space<vmem>>, %arg4: memref<128x32xf32, #tpu.memory_space<vmem>>, %arg5: memref<2x10x16x32xf32, #tpu.memory_space<vmem>>) attributes {dimension_semantics = [], scalar_prefetch = 0 : i64, scratch_operands = 1 : i64, tpu.core_type = #tpu.core_type<tc>} {
    %c0 = arith.constant 0 : index
    %c0_0 = arith.constant 0 : index
    %0 = vector.load %arg0[%c0, %c0_0] : memref<320x32xf32, #tpu.memory_space<vmem>>, vector<320x32xf32>
    %c0_1 = arith.constant 0 : index
    %c0_2 = arith.constant 0 : index
    %1 = vector.load %arg1[%c0_1, %c0_2] : memref<32x32xf32, #tpu.memory_space<vmem>>, vector<32x32xf32>
    %cst = arith.constant dense<0.000000e+00> : vector<320x32xf32>
    %2 = tpu.matmul %0, %1, %cst {dimension_numbers = #tpu.dot_dimension_numbers<[1], [0], [0], [1], [0, 0, 1, 1], [], []>} : vector<320x32xf32>, vector<32x32xf32>, vector<320x32xf32> -> vector<320x32xf32>
    %cst_3 = arith.constant dense<0.000000e+00> : vector<32xf32>
    %3 = vector.multi_reduction <add>, %2, %cst_3 [0] : vector<320x32xf32> to vector<32xf32>
    %4 = vector.shape_cast %3 : vector<32xf32> to vector<1x32xf32>
    %cst_4 = arith.constant 5.000000e-03 : f32
    %5 = vector.broadcast %cst_4 : f32 to vector<1x32xf32>
    %6 = arith.mulf %4, %5 : vector<1x32xf32>
    %7 = arith.mulf %2, %2 : vector<320x32xf32>
    %cst_5 = arith.constant dense<0.000000e+00> : vector<32xf32>
    %8 = vector.multi_reduction <add>, %7, %cst_5 [0] : vector<320x32xf32> to vector<32xf32>
    %9 = vector.shape_cast %8 : vector<32xf32> to vector<1x32xf32>
    %cst_6 = arith.constant 5.000000e-03 : f32
    %10 = vector.broadcast %cst_6 : f32 to vector<1x32xf32>
    %11 = arith.mulf %9, %10 : vector<1x32xf32>
    %12 = arith.mulf %6, %6 : vector<1x32xf32>
    %13 = arith.subf %11, %12 : vector<1x32xf32>
    %c0_7 = arith.constant 0 : index
    %c0_8 = arith.constant 0 : index
    %14 = vector.load %arg3[%c0_7, %c0_8] : memref<4x32xf32, #tpu.memory_space<vmem>>, vector<1x32xf32>
    %cst_9 = arith.constant 9.99999974E-6 : f32
    %15 = vector.broadcast %cst_9 : f32 to vector<1x32xf32>
    %16 = arith.addf %13, %15 : vector<1x32xf32>
    %17 = math.rsqrt %16 : vector<1x32xf32>
    %18 = arith.mulf %14, %17 : vector<1x32xf32>
    %c1 = arith.constant 1 : index
    %c0_10 = arith.constant 0 : index
    %19 = vector.load %arg3[%c1, %c0_10] : memref<4x32xf32, #tpu.memory_space<vmem>>, vector<1x32xf32>
    %20 = arith.mulf %6, %18 : vector<1x32xf32>
    %21 = arith.subf %19, %20 : vector<1x32xf32>
    %22 = vector.broadcast %18 : vector<1x32xf32> to vector<320x32xf32>
    %23 = arith.mulf %2, %22 : vector<320x32xf32>
    %24 = vector.broadcast %21 : vector<1x32xf32> to vector<320x32xf32>
    %25 = arith.addf %23, %24 : vector<320x32xf32>
    %cst_11 = arith.constant 0.000000e+00 : f32
    %26 = vector.broadcast %cst_11 : f32 to vector<320x32xf32>
    %27 = arith.maximumf %25, %26 : vector<320x32xf32>
    %28 = vector.shape_cast %27 : vector<320x32xf32> to vector<2x10x16x32xf32>
    %c0_12 = arith.constant 0 : index
    %c0_13 = arith.constant 0 : index
    %c0_14 = arith.constant 0 : index
    %c0_15 = arith.constant 0 : index
    %29 = vector.load %arg5[%c0_12, %c0_13, %c0_14, %c0_15] : memref<2x10x16x32xf32, #tpu.memory_space<vmem>>, vector<2x10x16x32xf32>
    tpu.vector_store %arg5[%c0_12, %c0_13, %c0_14, %c0_15], %28 {strides = array<i32>} : memref<2x10x16x32xf32, #tpu.memory_space<vmem>>, vector<2x10x16x32xf32>,
    %c0_16 = arith.constant 0 : index
    %c0_17 = arith.constant 0 : index
    %c0_18 = arith.constant 0 : index
    %c0_19 = arith.constant 0 : index
    %30 = vector.load %arg5[%c0_16, %c0_17, %c0_18, %c0_19] : memref<2x10x16x32xf32, #tpu.memory_space<vmem>>, vector<2x8x8x32xf32>
    %31 = vector.shape_cast %30 : vector<2x8x8x32xf32> to vector<128x32xf32>
    %c0_20 = arith.constant 0 : index
    %c0_21 = arith.constant 0 : index
    %c1_22 = arith.constant 1 : index
    %c0_23 = arith.constant 0 : index
    %32 = vector.load %arg5[%c0_20, %c0_21, %c1_22, %c0_23] : memref<2x10x16x32xf32, #tpu.memory_space<vmem>>, vector<2x8x8x32xf32>
    %33 = vector.shape_cast %32 : vector<2x8x8x32xf32> to vector<128x32xf32>
    %c0_24 = arith.constant 0 : index
    %c0_25 = arith.constant 0 : index
    %c2 = arith.constant 2 : index
    %c0_26 = arith.constant 0 : index
    %34 = vector.load %arg5[%c0_24, %c0_25, %c2, %c0_26] : memref<2x10x16x32xf32, #tpu.memory_space<vmem>>, vector<2x8x8x32xf32>
    %35 = vector.shape_cast %34 : vector<2x8x8x32xf32> to vector<128x32xf32>
    %36 = tpu.concatenate %31, %33, %35 in 1 : vector<128x32xf32>, vector<128x32xf32>, vector<128x32xf32> -> vector<128x96xf32>
    %c0_27 = arith.constant 0 : index
    %c0_28 = arith.constant 0 : index
    %c0_29 = arith.constant 0 : index
    %37 = vector.load %arg2[%c0_27, %c0_28, %c0_29] : memref<3x96x32xf32, #tpu.memory_space<vmem>>, vector<1x96x32xf32>
    %38 = vector.shape_cast %37 : vector<1x96x32xf32> to vector<96x32xf32>
    %cst_30 = arith.constant dense<0.000000e+00> : vector<128x32xf32>
    %39 = tpu.matmul %36, %38, %cst_30 {dimension_numbers = #tpu.dot_dimension_numbers<[1], [0], [0], [1], [0, 0, 1, 1], [], []>} : vector<128x96xf32>, vector<96x32xf32>, vector<128x32xf32> -> vector<128x32xf32>
    %c0_31 = arith.constant 0 : index
    %c1_32 = arith.constant 1 : index
    %c0_33 = arith.constant 0 : index
    %c0_34 = arith.constant 0 : index
    %40 = vector.load %arg5[%c0_31, %c1_32, %c0_33, %c0_34] : memref<2x10x16x32xf32, #tpu.memory_space<vmem>>, vector<2x8x8x32xf32>
    %41 = vector.shape_cast %40 : vector<2x8x8x32xf32> to vector<128x32xf32>
    %c0_35 = arith.constant 0 : index
    %c1_36 = arith.constant 1 : index
    %c1_37 = arith.constant 1 : index
    %c0_38 = arith.constant 0 : index
    %42 = vector.load %arg5[%c0_35, %c1_36, %c1_37, %c0_38] : memref<2x10x16x32xf32, #tpu.memory_space<vmem>>, vector<2x8x8x32xf32>
    %43 = vector.shape_cast %42 : vector<2x8x8x32xf32> to vector<128x32xf32>
    %c0_39 = arith.constant 0 : index
    %c1_40 = arith.constant 1 : index
    %c2_41 = arith.constant 2 : index
    %c0_42 = arith.constant 0 : index
    %44 = vector.load %arg5[%c0_39, %c1_40, %c2_41, %c0_42] : memref<2x10x16x32xf32, #tpu.memory_space<vmem>>, vector<2x8x8x32xf32>
    %45 = vector.shape_cast %44 : vector<2x8x8x32xf32> to vector<128x32xf32>
    %46 = tpu.concatenate %41, %43, %45 in 1 : vector<128x32xf32>, vector<128x32xf32>, vector<128x32xf32> -> vector<128x96xf32>
    %c1_43 = arith.constant 1 : index
    %c0_44 = arith.constant 0 : index
    %c0_45 = arith.constant 0 : index
    %47 = vector.load %arg2[%c1_43, %c0_44, %c0_45] : memref<3x96x32xf32, #tpu.memory_space<vmem>>, vector<1x96x32xf32>
    %48 = vector.shape_cast %47 : vector<1x96x32xf32> to vector<96x32xf32>
    %cst_46 = arith.constant dense<0.000000e+00> : vector<128x32xf32>
    %49 = tpu.matmul %46, %48, %cst_46 {dimension_numbers = #tpu.dot_dimension_numbers<[1], [0], [0], [1], [0, 0, 1, 1], [], []>} : vector<128x96xf32>, vector<96x32xf32>, vector<128x32xf32> -> vector<128x32xf32>
    %50 = arith.addf %39, %49 : vector<128x32xf32>
    %c0_47 = arith.constant 0 : index
    %c2_48 = arith.constant 2 : index
    %c0_49 = arith.constant 0 : index
    %c0_50 = arith.constant 0 : index
    %51 = vector.load %arg5[%c0_47, %c2_48, %c0_49, %c0_50] : memref<2x10x16x32xf32, #tpu.memory_space<vmem>>, vector<2x8x8x32xf32>
    %52 = vector.shape_cast %51 : vector<2x8x8x32xf32> to vector<128x32xf32>
    %c0_51 = arith.constant 0 : index
    %c2_52 = arith.constant 2 : index
    %c1_53 = arith.constant 1 : index
    %c0_54 = arith.constant 0 : index
    %53 = vector.load %arg5[%c0_51, %c2_52, %c1_53, %c0_54] : memref<2x10x16x32xf32, #tpu.memory_space<vmem>>, vector<2x8x8x32xf32>
    %54 = vector.shape_cast %53 : vector<2x8x8x32xf32> to vector<128x32xf32>
    %c0_55 = arith.constant 0 : index
    %c2_56 = arith.constant 2 : index
    %c2_57 = arith.constant 2 : index
    %c0_58 = arith.constant 0 : index
    %55 = vector.load %arg5[%c0_55, %c2_56, %c2_57, %c0_58] : memref<2x10x16x32xf32, #tpu.memory_space<vmem>>, vector<2x8x8x32xf32>
    %56 = vector.shape_cast %55 : vector<2x8x8x32xf32> to vector<128x32xf32>
    %57 = tpu.concatenate %52, %54, %56 in 1 : vector<128x32xf32>, vector<128x32xf32>, vector<128x32xf32> -> vector<128x96xf32>
    %c2_59 = arith.constant 2 : index
    %c0_60 = arith.constant 0 : index
    %c0_61 = arith.constant 0 : index
    %58 = vector.load %arg2[%c2_59, %c0_60, %c0_61] : memref<3x96x32xf32, #tpu.memory_space<vmem>>, vector<1x96x32xf32>
    %59 = vector.shape_cast %58 : vector<1x96x32xf32> to vector<96x32xf32>
    %cst_62 = arith.constant dense<0.000000e+00> : vector<128x32xf32>
    %60 = tpu.matmul %57, %59, %cst_62 {dimension_numbers = #tpu.dot_dimension_numbers<[1], [0], [0], [1], [0, 0, 1, 1], [], []>} : vector<128x96xf32>, vector<96x32xf32>, vector<128x32xf32> -> vector<128x32xf32>
    %61 = arith.addf %50, %60 : vector<128x32xf32>
    %cst_63 = arith.constant dense<0.000000e+00> : vector<32xf32>
    %62 = vector.multi_reduction <add>, %61, %cst_63 [0] : vector<128x32xf32> to vector<32xf32>
    %63 = vector.shape_cast %62 : vector<32xf32> to vector<1x32xf32>
    %cst_64 = arith.constant 7.812500e-03 : f32
    %64 = vector.broadcast %cst_64 : f32 to vector<1x32xf32>
    %65 = arith.mulf %63, %64 : vector<1x32xf32>
    %66 = arith.mulf %61, %61 : vector<128x32xf32>
    %cst_65 = arith.constant dense<0.000000e+00> : vector<32xf32>
    %67 = vector.multi_reduction <add>, %66, %cst_65 [0] : vector<128x32xf32> to vector<32xf32>
    %68 = vector.shape_cast %67 : vector<32xf32> to vector<1x32xf32>
    %cst_66 = arith.constant 7.812500e-03 : f32
    %69 = vector.broadcast %cst_66 : f32 to vector<1x32xf32>
    %70 = arith.mulf %68, %69 : vector<1x32xf32>
    %71 = arith.mulf %65, %65 : vector<1x32xf32>
    %72 = arith.subf %70, %71 : vector<1x32xf32>
    %c2_67 = arith.constant 2 : index
    %c0_68 = arith.constant 0 : index
    %73 = vector.load %arg3[%c2_67, %c0_68] : memref<4x32xf32, #tpu.memory_space<vmem>>, vector<1x32xf32>
    %cst_69 = arith.constant 9.99999974E-6 : f32
    %74 = vector.broadcast %cst_69 : f32 to vector<1x32xf32>
    %75 = arith.addf %72, %74 : vector<1x32xf32>
    %76 = math.rsqrt %75 : vector<1x32xf32>
    %77 = arith.mulf %73, %76 : vector<1x32xf32>
    %c3 = arith.constant 3 : index
    %c0_70 = arith.constant 0 : index
    %78 = vector.load %arg3[%c3, %c0_70] : memref<4x32xf32, #tpu.memory_space<vmem>>, vector<1x32xf32>
    %79 = arith.mulf %65, %77 : vector<1x32xf32>
    %80 = arith.subf %78, %79 : vector<1x32xf32>
    %81 = vector.broadcast %77 : vector<1x32xf32> to vector<128x32xf32>
    %82 = arith.mulf %61, %81 : vector<128x32xf32>
    %83 = vector.broadcast %80 : vector<1x32xf32> to vector<128x32xf32>
    %84 = arith.addf %82, %83 : vector<128x32xf32>
    %cst_71 = arith.constant 0.000000e+00 : f32
    %85 = vector.broadcast %cst_71 : f32 to vector<128x32xf32>
    %86 = arith.maximumf %84, %85 : vector<128x32xf32>
    %c0_72 = arith.constant 0 : index
    %c0_73 = arith.constant 0 : index
    %87 = vector.load %arg4[%c0_72, %c0_73] : memref<128x32xf32, #tpu.memory_space<vmem>>, vector<128x32xf32>
    tpu.vector_store %arg4[%c0_72, %c0_73], %86 {strides = array<i32>} : memref<128x32xf32, #tpu.memory_space<vmem>>, vector<128x32xf32>,
    return
  }
}

</mosaic_0001>

<llo_original>
// kernel: image_encoder_forward.1
$region0: #{image_encoder_forward.1}
  #allocation0 [shape = 'u32[]', space=smem, size = 0x4, offset = 0x4, fixed_abs, tag = 'smem constant byte address 0x4 - core index']
  #allocation1 [shape = 'u32[144,128]{1,0:T(1,128)}', space=vmem, size = 0x12000, scoped, tag = 'internal scratch']
  #allocation2 [shape = 'f32[2,10,16,32]{3,2,1,0:T(8,128)}', space=vmem, size = 0x28000, scoped, tag = 'scratch operand']
  %s0 = inlined_call_operand.vmem [shape: f32[320,32], index: 0, kind: input, shape index: {}]
  %s1 = inlined_call_operand.vmem [shape: f32[32,32], index: 1, kind: input, shape index: {}]
  %s2 = inlined_call_operand.vmem [shape: f32[3,96,32], index: 2, kind: input, shape index: {}]
  %s3 = inlined_call_operand.vmem [shape: f32[4,32], index: 3, kind: input, shape index: {}]
  %s4 = inlined_call_operand.hbm [shape: f32[128,32], index: 4, kind: output, shape index: {}]
  %s5 = sld [smem:[#allocation0]]
  $region26: #{image_encoder_forward.1} parent=0
    _
  %s7 = ssub.s32 1, %s5
  %s8 = scalar_select 0, %s7, %s5
  $region1: #{image_encoder_forward.1} parent=0
    #allocation3 [shape = 'u8[65536]{0}', space=vmem, size = 0x10000, scoped, tag = 'output window, operand 0, single buffered']
    #allocation4 [shape = 's32[1]{0}', space=sflag, size = 0x4, scoped, tag = 'scoped memory for image_encoder_forward.1']
    %9 = vsyncpa [#allocation4], 0
    // Predicated region
    $region2: #{image_encoder_forward.1} parent=1 // pred_check
      _
    $region3: #{image_encoder_forward.1} parent=1 // pred_check_branch
      %11 = sbr.rel (0) target = $region5
    $region4: #{image_encoder_forward.1} parent=1 // pred_region
      _
    $region5: #{image_encoder_forward.1} parent=1 // pred_fallthru
      _
    // Predicated region
    $region6: #{image_encoder_forward.1} parent=1 // pred_check
      _
    $region7: #{image_encoder_forward.1} parent=1 // pred_check_branch
      %13 = sbr.rel (0) target = $region9
    $region8: #{image_encoder_forward.1} parent=1 // pred_region
      _
    $region9: #{image_encoder_forward.1} parent=1 // pred_fallthru
      _
    // Predicated region
    $region10: #{image_encoder_forward.1} parent=1 // pred_check
      _
    $region11: #{image_encoder_forward.1} parent=1 // pred_check_branch
      %15 = sbr.rel (0) target = $region13
    $region12: #{image_encoder_forward.1} parent=1 // pred_region
      _
    $region13: #{image_encoder_forward.1} parent=1 // pred_fallthru
      _
    // Predicated region
    $region14: #{image_encoder_forward.1} parent=1 // pred_check
      _
    $region15: #{image_encoder_forward.1} parent=1 // pred_check_branch
      %17 = sbr.rel (0) target = $region17
    $region16: #{image_encoder_forward.1} parent=1 // pred_region
      _
    $region17: #{image_encoder_forward.1} parent=1 // pred_fallthru
      _
    %v18 = vld [vmem:[%s0] sm:$0xff]
    %v19 = vld [vmem:[%s0 + $0x8] sm:$0xff]
    %v20 = vld [vmem:[%s0 + $0x10] sm:$0xff]
    %v21 = vld [vmem:[%s0 + $0x18] sm:$0xff]
    %v22 = vld [vmem:[%s0 + $0x20] sm:$0xff]
    %v23 = vld [vmem:[%s0 + $0x28] sm:$0xff]
    %v24 = vld [vmem:[%s0 + $0x30] sm:$0xff]
    %v25 = vld [vmem:[%s0 + $0x38] sm:$0xff]
    %v26 = vld [vmem:[%s0 + $0x40] sm:$0xff]
    %v27 = vld [vmem:[%s0 + $0x48] sm:$0xff]
    %v28 = vld [vmem:[%s0 + $0x50] sm:$0xff]
    %v29 = vld [vmem:[%s0 + $0x58] sm:$0xff]
    %v30 = vld [vmem:[%s0 + $0x60] sm:$0xff]
    %v31 = vld [vmem:[%s0 + $0x68] sm:$0xff]
    %v32 = vld [vmem:[%s0 + $0x70] sm:$0xff]
    %v33 = vld [vmem:[%s0 + $0x78] sm:$0xff]
    %v34 = vld [vmem:[%s0 + $0x80] sm:$0xff]
    %v35 = vld [vmem:[%s0 + $0x88] sm:$0xff]
    %v36 = vld [vmem:[%s0 + $0x90] sm:$0xff]
    %v37 = vld [vmem:[%s0 + $0x98] sm:$0xff]
    %v38 = vld [vmem:[%s0 + $0xa0] sm:$0xff]
    %v39 = vld [vmem:[%s0 + $0xa8] sm:$0xff]
    %v40 = vld [vmem:[%s0 + $0xb0] sm:$0xff]
    %v41 = vld [vmem:[%s0 + $0xb8] sm:$0xff]
    %v42 = vld [vmem:[%s0 + $0xc0] sm:$0xff]
    %v43 = vld [vmem:[%s0 + $0xc8] sm:$0xff]
    %v44 = vld [vmem:[%s0 + $0xd0] sm:$0xff]
    %v45 = vld [vmem:[%s0 + $0xd8] sm:$0xff]
    %v46 = vld [vmem:[%s0 + $0xe0] sm:$0xff]
    %v47 = vld [vmem:[%s0 + $0xe8] sm:$0xff]
    %v48 = vld [vmem:[%s0 + $0xf0] sm:$0xff]
    %v49 = vld [vmem:[%s0 + $0xf8] sm:$0xff]
    %v50 = vld [vmem:[%s0 + $0x100] sm:$0xff]
    %v51 = vld [vmem:[%s0 + $0x108] sm:$0xff]
    %v52 = vld [vmem:[%s0 + $0x110] sm:$0xff]
    %v53 = vld [vmem:[%s0 + $0x118] sm:$0xff]
    %v54 = vld [vmem:[%s0 + $0x120] sm:$0xff]
    %v55 = vld [vmem:[%s0 + $0x128] sm:$0xff]
    %v56 = vld [vmem:[%s0 + $0x130] sm:$0xff]
    %v57 = vld [vmem:[%s0 + $0x138] sm:$0xff]
    %v58 = vld [vmem:[%s1] sm:$0xff]
    %v59 = vld [vmem:[%s1 + $0x8] sm:$0xff]
    %v60 = vld [vmem:[%s1 + $0x10] sm:$0xff]
    %v61 = vld [vmem:[%s1 + $0x18] sm:$0xff]
    %vm62 = vcmask 261120
    %v64 = vsel %vm62, %v18, 0
    %v67 = vsel %vm62, %v19, 0
    %v70 = vsel %vm62, %v20, 0
    %v73 = vsel %vm62, %v21, 0
    %v76 = vsel %vm62, %v22, 0
    %v79 = vsel %vm62, %v23, 0
    %v82 = vsel %vm62, %v24, 0
    %v85 = vsel %vm62, %v25, 0
    %v88 = vsel %vm62, %v26, 0
    %v91 = vsel %vm62, %v27, 0
    %v94 = vsel %vm62, %v28, 0
    %v97 = vsel %vm62, %v29, 0
    %v100 = vsel %vm62, %v30, 0
    %v103 = vsel %vm62, %v31, 0
    %v106 = vsel %vm62, %v32, 0
    %v109 = vsel %vm62, %v33, 0
    %v112 = vsel %vm62, %v34, 0
    %v115 = vsel %vm62, %v35, 0
    %v118 = vsel %vm62, %v36, 0
    %v121 = vsel %vm62, %v37, 0
    %v124 = vsel %vm62, %v38, 0
    %v127 = vsel %vm62, %v39, 0
    %v130 = vsel %vm62, %v40, 0
    %v133 = vsel %vm62, %v41, 0
    %v136 = vsel %vm62, %v42, 0
    %v139 = vsel %vm62, %v43, 0
    %v142 = vsel %vm62, %v44, 0
    %v145 = vsel %vm62, %v45, 0
    %v148 = vsel %vm62, %v46, 0
    %v151 = vsel %vm62, %v47, 0
    %v154 = vsel %vm62, %v48, 0
    %v157 = vsel %vm62, %v49, 0
    %v160 = vsel %vm62, %v50, 0
    %v163 = vsel %vm62, %v51, 0
    %v166 = vsel %vm62, %v52, 0
    %v169 = vsel %vm62, %v53, 0
    %v172 = vsel %vm62, %v54, 0
    %v175 = vsel %vm62, %v55, 0
    %v178 = vsel %vm62, %v56, 0
    %v181 = vsel %vm62, %v57, 0
    %183 = vmatprep.subr.mxu0 0.0
    %184 = vmatpush1.msra.mxu0 %v58
    %185 = vmatprep.subr.mxu0 0.0
    %186 = vmatpush1.msra.mxu0 %v59
    %187 = vmatprep.subr.mxu0 0.0
    %188 = vmatpush1.msra.mxu0 %v60
    %189 = vmatprep.subr.mxu0 0.0
    %190 = vmatpush1.msra.mxu0 %v61
    %191 = vmatprep.subr.mxu0 0.0
    %192 = vmatpush1.msra.mxu0 0.0
    %193 = vmatprep.subr.mxu0 0.0
    %194 = vmatpush1.msra.mxu0 0.0
    %195 = vmatprep.subr.mxu0 0.0
    %196 = vmatpush1.msra.mxu0 0.0
    %197 = vmatprep.subr.mxu0 0.0
    %198 = vmatpush1.msra.mxu0 0.0
    %199 = vmatprep.subr.mxu0 0.0
    %200 = vmatpush1.msra.mxu0 0.0
    %201 = vmatprep.subr.mxu0 0.0
    %202 = vmatpush1.msra.mxu0 0.0
    %203 = vmatprep.subr.mxu0 0.0
    %204 = vmatpush1.msra.mxu0 0.0
    %205 = vmatprep.subr.mxu0 0.0
    %206 = vmatpush1.msra.mxu0 0.0
    %207 = vmatprep.subr.mxu0 0.0
    %208 = vmatpush1.msra.mxu0 0.0
    %209 = vmatprep.subr.mxu0 0.0
    %210 = vmatpush1.msra.mxu0 0.0
    %211 = vmatprep.subr.mxu0 0.0
    %212 = vmatpush1.msra.mxu0 0.0
    %213 = vmatprep.subr.mxu0 0.0
    %214 = vmatpush1.msra.mxu0 0.0
    %215 = vmatprep.subr.mxu0 0.0
    %216 = vmatpush1.msra.mxu0 0.0
    %217 = vmatprep.subr.mxu0 0.0
    %218 = vmatpush1.msra.mxu0 0.0
    %219 = vmatprep.subr.mxu0 0.0
    %220 = vmatpush1.msra.mxu0 0.0
    %221 = vmatprep.subr.mxu0 0.0
    %222 = vmatpush1.msra.mxu0 0.0
    %223 = vmatprep.subr.mxu0 0.0
    %224 = vmatpush1.msra.mxu0 0.0
    %225 = vmatprep.subr.mxu0 0.0
    %226 = vmatpush1.msra.mxu0 0.0
    %227 = vmatprep.subr.mxu0 0.0
    %228 = vmatpush1.msra.mxu0 0.0
    %229 = vmatprep.subr.mxu0 0.0
    %230 = vmatpush1.msra.mxu0 0.0
    %231 = vmatprep.subr.mxu0 0.0
    %232 = vmatpush1.msra.mxu0 0.0
    %233 = vmatprep.subr.mxu0 0.0
    %234 = vmatpush1.msra.mxu0 0.0
    %235 = vmatprep.subr.mxu0 0.0
    %236 = vmatpush1.msra.mxu0 0.0
    %237 = vmatprep.subr.mxu0 0.0
    %238 = vmatpush1.msra.mxu0 0.0
    %239 = vmatprep.subr.mxu0 0.0
    %240 = vmatpush1.msra.mxu0 0.0
    %241 = vmatprep.subr.mxu0 0.0
    %242 = vmatpush1.msra.mxu0 0.0
    %243 = vmatprep.subr.mxu0 0.0
    %244 = vmatpush1.msra.mxu0 0.0
    %245 = vmatprep.subr.mxu0 0.0
    %246 = vmatpush1.msra.mxu0 0.0
    %247 = vmatprep.mubr.f32.mxu0 0.0
    %248 = vmatmul.mubr.f32.gmra.mrb[0].mxu0 %v64
    %v249 = vpop.f32.mrb[0].mxu0
    %v250 = vadd.f32 0.0, %v249
    %v251 = vpop.f32.mrb[0].mxu0
    %252 = vmatprep.mubr.f32.mxu0 0.0
    %253 = vmatmul.mubr.f32.gmra.mrb[0].mxu0 %v67
    %v254 = vpop.f32.mrb[0].mxu0
    %v255 = vadd.f32 0.0, %v254
    %v256 = vpop.f32.mrb[0].mxu0
    %257 = vmatprep.mubr.f32.mxu0 0.0
    %258 = vmatmul.mubr.f32.gmra.mrb[0].mxu0 %v70
    %v259 = vpop.f32.mrb[0].mxu0
    %v260 = vadd.f32 0.0, %v259
    %v261 = vpop.f32.mrb[0].mxu0
    %262 = vmatprep.mubr.f32.mxu0 0.0
    %263 = vmatmul.mubr.f32.gmra.mrb[0].mxu0 %v73
    %v264 = vpop.f32.mrb[0].mxu0
    %v265 = vadd.f32 0.0, %v264
    %v266 = vpop.f32.mrb[0].mxu0
    %267 = vmatprep.mubr.f32.mxu0 0.0
    %268 = vmatmul.mubr.f32.gmra.mrb[0].mxu0 %v76
    %v269 = vpop.f32.mrb[0].mxu0
    %v270 = vadd.f32 0.0, %v269
    %v271 = vpop.f32.mrb[0].mxu0
    %272 = vmatprep.mubr.f32.mxu0 0.0
    %273 = vmatmul.mubr.f32.gmra.mrb[0].mxu0 %v79
    %v274 = vpop.f32.mrb[0].mxu0
    %v275 = vadd.f32 0.0, %v274
    %v276 = vpop.f32.mrb[0].mxu0
    %277 = vmatprep.mubr.f32.mxu0 0.0
    %278 = vmatmul.mubr.f32.gmra.mrb[0].mxu0 %v82
    %v279 = vpop.f32.mrb[0].mxu0
    %v280 = vadd.f32 0.0, %v279
    %v281 = vpop.f32.mrb[0].mxu0
    %282 = vmatprep.mubr.f32.mxu0 0.0
    %283 = vmatmul.mubr.f32.gmra.mrb[0].mxu0 %v85
    %v284 = vpop.f32.mrb[0].mxu0
    %v285 = vadd.f32 0.0, %v284
    %v286 = vpop.f32.mrb[0].mxu0
    %287 = vmatprep.mubr.f32.mxu0 0.0
    %288 = vmatmul.mubr.f32.gmra.mrb[0].mxu0 %v88
    %v289 = vpop.f32.mrb[0].mxu0
    %v290 = vadd.f32 0.0, %v289
    %v291 = vpop.f32.mrb[0].mxu0
    %292 = vmatprep.mubr.f32.mxu0 0.0
    %293 = vmatmul.mubr.f32.gmra.mrb[0].mxu0 %v91
    %v294 = vpop.f32.mrb[0].mxu0
    %v295 = vadd.f32 0.0, %v294
    %v296 = vpop.f32.mrb[0].mxu0
    %297 = vmatprep.mubr.f32.mxu0 0.0
    %298 = vmatmul.mubr.f32.gmra.mrb[0].mxu0 %v94
    %v299 = vpop.f32.mrb[0].mxu0
    %v300 = vadd.f32 0.0, %v299
    %v301 = vpop.f32.mrb[0].mxu0
    %302 = vmatprep.mubr.f32.mxu0 0.0
    %303 = vmatmul.mubr.f32.gmra.mrb[0].mxu0 %v97
    %v304 = vpop.f32.mrb[0].mxu0
    %v305 = vadd.f32 0.0, %v304
    %v306 = vpop.f32.mrb[0].mxu0
    %307 = vmatprep.mubr.f32.mxu0 0.0
    %308 = vmatmul.mubr.f32.gmra.mrb[0].mxu0 %v100
    %v309 = vpop.f32.mrb[0].mxu0
    %v310 = vadd.f32 0.0, %v309
    %v311 = vpop.f32.mrb[0].mxu0
    %312 = vmatprep.mubr.f32.mxu0 0.0
    %313 = vmatmul.mubr.f32.gmra.mrb[0].mxu0 %v103
    %v314 = vpop.f32.mrb[0].mxu0
    %v315 = vadd.f32 0.0, %v314
    %v316 = vpop.f32.mrb[0].mxu0
    %317 = vmatprep.mubr.f32.mxu0 0.0
    %318 = vmatmul.mubr.f32.gmra.mrb[0].mxu0 %v106
    %v319 = vpop.f32.mrb[0].mxu0
    %v320 = vadd.f32 0.0, %v319
    %v321 = vpop.f32.mrb[0].mxu0
    %322 = vmatprep.mubr.f32.mxu0 0.0
    %323 = vmatmul.mubr.f32.gmra.mrb[0].mxu0 %v109
    %v324 = vpop.f32.mrb[0].mxu0
    %v325 = vadd.f32 0.0, %v324
    %v326 = vpop.f32.mrb[0].mxu0
    %327 = vmatprep.mubr.f32.mxu0 0.0
    %328 = vmatmul.mubr.f32.gmra.mrb[0].mxu0 %v112
    %v329 = vpop.f32.mrb[0].mxu0
    %v330 = vadd.f32 0.0, %v329
    %v331 = vpop.f32.mrb[0].mxu0
    %332 = vmatprep.mubr.f32.mxu0 0.0
    %333 = vmatmul.mubr.f32.gmra.mrb[0].mxu0 %v115
    %v334 = vpop.f32.mrb[0].mxu0
    %v335 = vadd.f32 0.0, %v334
    %v336 = vpop.f32.mrb[0].mxu0
    %337 = vmatprep.mubr.f32.mxu0 0.0
    %338 = vmatmul.mubr.f32.gmra.mrb[0].mxu0 %v118
    %v339 = vpop.f32.mrb[0].mxu0
    %v340 = vadd.f32 0.0, %v339
    %v341 = vpop.f32.mrb[0].mxu0
    %342 = vmatprep.mubr.f32.mxu0 0.0
    %343 = vmatmul.mubr.f32.gmra.mrb[0].mxu0 %v121
    %v344 = vpop.f32.mrb[0].mxu0
    %v345 = vadd.f32 0.0, %v344
    %v346 = vpop.f32.mrb[0].mxu0
    %347 = vmatprep.mubr.f32.mxu0 0.0
    %348 = vmatmul.mubr.f32.gmra.mrb[0].mxu0 %v124
    %v349 = vpop.f32.mrb[0].mxu0
    %v350 = vadd.f32 0.0, %v349
    %v351 = vpop.f32.mrb[0].mxu0
    %352 = vmatprep.mubr.f32.mxu0 0.0
    %353 = vmatmul.mubr.f32.gmra.mrb[0].mxu0 %v127
    %v354 = vpop.f32.mrb[0].mxu0
    %v355 = vadd.f32 0.0, %v354
    %v356 = vpop.f32.mrb[0].mxu0
    %357 = vmatprep.mubr.f32.mxu0 0.0
    %358 = vmatmul.mubr.f32.gmra.mrb[0].mxu0 %v130
    %v359 = vpop.f32.mrb[0].mxu0
    %v360 = vadd.f32 0.0, %v359
    %v361 = vpop.f32.mrb[0].mxu0
    %362 = vmatprep.mubr.f32.mxu0 0.0
    %363 = vmatmul.mubr.f32.gmra.mrb[0].mxu0 %v133
    %v364 = vpop.f32.mrb[0].mxu0
    %v365 = vadd.f32 0.0, %v364
    %v366 = vpop.f32.mrb[0].mxu0
    %367 = vmatprep.mubr.f32.mxu0 0.0
    %368 = vmatmul.mubr.f32.gmra.mrb[0].mxu0 %v136
    %v369 = vpop.f32.mrb[0].mxu0
    %v370 = vadd.f32 0.0, %v369
    %v371 = vpop.f32.mrb[0].mxu0
    %372 = vmatprep.mubr.f32.mxu0 0.0
    %373 = vmatmul.mubr.f32.gmra.mrb[0].mxu0 %v139
    %v374 = vpop.f32.mrb[0].mxu0
    %v375 = vadd.f32 0.0, %v374
    %v376 = vpop.f32.mrb[0].mxu0
    %377 = vmatprep.mubr.f32.mxu0 0.0
    %378 = vmatmul.mubr.f32.gmra.mrb[0].mxu0 %v142
    %v379 = vpop.f32.mrb[0].mxu0
    %v380 = vadd.f32 0.0, %v379
    %v381 = vpop.f32.mrb[0].mxu0
    %382 = vmatprep.mubr.f32.mxu0 0.0
    %383 = vmatmul.mubr.f32.gmra.mrb[0].mxu0 %v145
    %v384 = vpop.f32.mrb[0].mxu0
    %v385 = vadd.f32 0.0, %v384
    %v386 = vpop.f32.mrb[0].mxu0
    %387 = vmatprep.mubr.f32.mxu0 0.0
    %388 = vmatmul.mubr.f32.gmra.mrb[0].mxu0 %v148
    %v389 = vpop.f32.mrb[0].mxu0
    %v390 = vadd.f32 0.0, %v389
    %v391 = vpop.f32.mrb[0].mxu0
    %392 = vmatprep.mubr.f32.mxu0 0.0
    %393 = vmatmul.mubr.f32.gmra.mrb[0].mxu0 %v151
    %v394 = vpop.f32.mrb[0].mxu0
    %v395 = vadd.f32 0.0, %v394
    %v396 = vpop.f32.mrb[0].mxu0
    %397 = vmatprep.mubr.f32.mxu0 0.0
    %398 = vmatmul.mubr.f32.gmra.mrb[0].mxu0 %v154
    %v399 = vpop.f32.mrb[0].mxu0
    %v400 = vadd.f32 0.0, %v399
    %v401 = vpop.f32.mrb[0].mxu0
    %402 = vmatprep.mubr.f32.mxu0 0.0
    %403 = vmatmul.mubr.f32.gmra.mrb[0].mxu0 %v157
    %v404 = vpop.f32.mrb[0].mxu0
    %v405 = vadd.f32 0.0, %v404
    %v406 = vpop.f32.mrb[0].mxu0
    %407 = vmatprep.mubr.f32.mxu0 0.0
    %408 = vmatmul.mubr.f32.gmra.mrb[0].mxu0 %v160
    %v409 = vpop.f32.mrb[0].mxu0
    %v410 = vadd.f32 0.0, %v409
    %v411 = vpop.f32.mrb[0].mxu0
    %412 = vmatprep.mubr.f32.mxu0 0.0
    %413 = vmatmul.mubr.f32.gmra.mrb[0].mxu0 %v163
    %v414 = vpop.f32.mrb[0].mxu0
    %v415 = vadd.f32 0.0, %v414
    %v416 = vpop.f32.mrb[0].mxu0
    %417 = vmatprep.mubr.f32.mxu0 0.0
    %418 = vmatmul.mubr.f32.gmra.mrb[0].mxu0 %v166
    %v419 = vpop.f32.mrb[0].mxu0
    %v420 = vadd.f32 0.0, %v419
    %v421 = vpop.f32.mrb[0].mxu0
    %422 = vmatprep.mubr.f32.mxu0 0.0
    %423 = vmatmul.mubr.f32.gmra.mrb[0].mxu0 %v169
    %v424 = vpop.f32.mrb[0].mxu0
    %v425 = vadd.f32 0.0, %v424
    %v426 = vpop.f32.mrb[0].mxu0
    %427 = vmatprep.mubr.f32.mxu0 0.0
    %428 = vmatmul.mubr.f32.gmra.mrb[0].mxu0 %v172
    %v429 = vpop.f32.mrb[0].mxu0
    %v430 = vadd.f32 0.0, %v429
    %v431 = vpop.f32.mrb[0].mxu0
    %432 = vmatprep.mubr.f32.mxu0 0.0
    %433 = vmatmul.mubr.f32.gmra.mrb[0].mxu0 %v175
    %v434 = vpop.f32.mrb[0].mxu0
    %v435 = vadd.f32 0.0, %v434
    %v436 = vpop.f32.mrb[0].mxu0
    %437 = vmatprep.mubr.f32.mxu0 0.0
    %438 = vmatmul.mubr.f32.gmra.mrb[0].mxu0 %v178
    %v439 = vpop.f32.mrb[0].mxu0
    %v440 = vadd.f32 0.0, %v439
    %v441 = vpop.f32.mrb[0].mxu0
    %442 = vmatprep.mubr.f32.mxu0 0.0
    %443 = vmatmul.mubr.f32.gmra.mrb[0].mxu0 %v181
    %v444 = vpop.f32.mrb[0].mxu0
    %v445 = vadd.f32 0.0, %v444
    %v446 = vpop.f32.mrb[0].mxu0
    %447 = vdwg.mxu0
    %v448 = vsel %vm62, %v250, 0.0
    %v449 = vsel %vm62, %v255, 0.0
    %v450 = vadd.f32 %v448, %v449
    %v451 = vsel %vm62, %v260, 0.0
    %v452 = vadd.f32 %v450, %v451
    %v453 = vsel %vm62, %v265, 0.0
    %v454 = vadd.f32 %v452, %v453
    %v455 = vsel %vm62, %v270, 0.0
    %v456 = vadd.f32 %v454, %v455
    %v457 = vsel %vm62, %v275, 0.0
    %v458 = vadd.f32 %v456, %v457
    %v459 = vsel %vm62, %v280, 0.0
    %v460 = vadd.f32 %v458, %v459
    %v461 = vsel %vm62, %v285, 0.0
    %v462 = vadd.f32 %v460, %v461
    %v463 = vsel %vm62, %v290, 0.0
    %v464 = vadd.f32 %v462, %v463
    %v465 = vsel %vm62, %v295, 0.0
    %v466 = vadd.f32 %v464, %v465
    %v467 = vsel %vm62, %v300, 0.0
    %v468 = vadd.f32 %v466, %v467
    %v469 = vsel %vm62, %v305, 0.0
    %v470 = vadd.f32 %v468, %v469
    %v471 = vsel %vm62, %v310, 0.0
    %v472 = vadd.f32 %v470, %v471
    %v473 = vsel %vm62, %v315, 0.0
    %v474 = vadd.f32 %v472, %v473
    %v475 = vsel %vm62, %v320, 0.0
    %v476 = vadd.f32 %v474, %v475
    %v477 = vsel %vm62, %v325, 0.0
    %v478 = vadd.f32 %v476, %v477
    %v479 = vsel %vm62, %v330, 0.0
    %v480 = vadd.f32 %v478, %v479
    %v481 = vsel %vm62, %v335, 0.0
    %v482 = vadd.f32 %v480, %v481
    %v483 = vsel %vm62, %v340, 0.0
    %v484 = vadd.f32 %v482, %v483
    %v485 = vsel %vm62, %v345, 0.0
    %v486 = vadd.f32 %v484, %v485
    %v487 = vsel %vm62, %v350, 0.0
    %v488 = vadd.f32 %v486, %v487
    %v489 = vsel %vm62, %v355, 0.0
    %v490 = vadd.f32 %v488, %v489
    %v491 = vsel %vm62, %v360, 0.0
    %v492 = vadd.f32 %v490, %v491
    %v493 = vsel %vm62, %v365, 0.0
    %v494 = vadd.f32 %v492, %v493
    %v495 = vsel %vm62, %v370, 0.0
    %v496 = vadd.f32 %v494, %v495
    %v497 = vsel %vm62, %v375, 0.0
    %v498 = vadd.f32 %v496, %v497
    %v499 = vsel %vm62, %v380, 0.0
    %v500 = vadd.f32 %v498, %v499
    %v501 = vsel %vm62, %v385, 0.0
    %v502 = vadd.f32 %v500, %v501
    %v503 = vsel %vm62, %v390, 0.0
    %v504 = vadd.f32 %v502, %v503
    %v505 = vsel %vm62, %v395, 0.0
    %v506 = vadd.f32 %v504, %v505
    %v507 = vsel %vm62, %v400, 0.0
    %v508 = vadd.f32 %v506, %v507
    %v509 = vsel %vm62, %v405, 0.0
    %v510 = vadd.f32 %v508, %v509
    %v511 = vsel %vm62, %v410, 0.0
    %v512 = vadd.f32 %v510, %v511
    %v513 = vsel %vm62, %v415, 0.0
    %v514 = vadd.f32 %v512, %v513
    %v515 = vsel %vm62, %v420, 0.0
    %v516 = vadd.f32 %v514, %v515
    %v517 = vsel %vm62, %v425, 0.0
    %v518 = vadd.f32 %v516, %v517
    %v519 = vsel %vm62, %v430, 0.0
    %v520 = vadd.f32 %v518, %v519
    %v521 = vsel %vm62, %v435, 0.0
    %v522 = vadd.f32 %v520, %v521
    %v523 = vsel %vm62, %v440, 0.0
    %v524 = vadd.f32 %v522, %v523
    %v525 = vsel %vm62, %v445, 0.0
    %v526 = vadd.f32 %v524, %v525
    %v527 = vrot.slane %v526, 4
    %v528 = vadd.f32 %v526, %v527
    %v529 = vrot.slane %v528, 2
    %v530 = vadd.f32 %v528, %v529
    %v531 = vrot.slane %v530, 1
    %v532 = vadd.f32 %v530, %v531
    %v533 = vmul.f32 %v532, 0.005
    %v534 = vmul.f32 %v250, %v250
    %v535 = vmul.f32 %v255, %v255
    %v536 = vmul.f32 %v260, %v260
    %v537 = vmul.f32 %v265, %v265
    %v538 = vmul.f32 %v270, %v270
    %v539 = vmul.f32 %v275, %v275
    %v540 = vmul.f32 %v280, %v280
    %v541 = vmul.f32 %v285, %v285
    %v542 = vmul.f32 %v290, %v290
    %v543 = vmul.f32 %v295, %v295
    %v544 = vmul.f32 %v300, %v300
    %v545 = vmul.f32 %v305, %v305
    %v546 = vmul.f32 %v310, %v310
    %v547 = vmul.f32 %v315, %v315
    %v548 = vmul.f32 %v320, %v320
    %v549 = vmul.f32 %v325, %v325
    %v550 = vmul.f32 %v330, %v330
    %v551 = vmul.f32 %v335, %v335
    %v552 = vmul.f32 %v340, %v340
    %v553 = vmul.f32 %v345, %v345
    %v554 = vmul.f32 %v350, %v350
    %v555 = vmul.f32 %v355, %v355
    %v556 = vmul.f32 %v360, %v360
    %v557 = vmul.f32 %v365, %v365
    %v558 = vmul.f32 %v370, %v370
    %v559 = vmul.f32 %v375, %v375
    %v560 = vmul.f32 %v380, %v380
    %v561 = vmul.f32 %v385, %v385
    %v562 = vmul.f32 %v390, %v390
    %v563 = vmul.f32 %v395, %v395
    %v564 = vmul.f32 %v400, %v400
    %v565 = vmul.f32 %v405, %v405
    %v566 = vmul.f32 %v410, %v410
    %v567 = vmul.f32 %v415, %v415
    %v568 = vmul.f32 %v420, %v420
    %v569 = vmul.f32 %v425, %v425
    %v570 = vmul.f32 %v430, %v430
    %v571 = vmul.f32 %v435, %v435
    %v572 = vmul.f32 %v440, %v440
    %v573 = vmul.f32 %v445, %v445
    %v574 = vsel %vm62, %v534, 0.0
    %v575 = vsel %vm62, %v535, 0.0
    %v576 = vadd.f32 %v574, %v575
    %v577 = vsel %vm62, %v536, 0.0
    %v578 = vadd.f32 %v576, %v577
    %v579 = vsel %vm62, %v537, 0.0
    %v580 = vadd.f32 %v578, %v579
    %v581 = vsel %vm62, %v538, 0.0
    %v582 = vadd.f32 %v580, %v581
    %v583 = vsel %vm62, %v539, 0.0
    %v584 = vadd.f32 %v582, %v583
    %v585 = vsel %vm62, %v540, 0.0
    %v586 = vadd.f32 %v584, %v585
    %v587 = vsel %vm62, %v541, 0.0
    %v588 = vadd.f32 %v586, %v587
    %v589 = vsel %vm62, %v542, 0.0
    %v590 = vadd.f32 %v588, %v589
    %v591 = vsel %vm62, %v543, 0.0
    %v592 = vadd.f32 %v590, %v591
    %v593 = vsel %vm62, %v544, 0.0
    %v594 = vadd.f32 %v592, %v593
    %v595 = vsel %vm62, %v545, 0.0
    %v596 = vadd.f32 %v594, %v595
    %v597 = vsel %vm62, %v546, 0.0
    %v598 = vadd.f32 %v596, %v597
    %v599 = vsel %vm62, %v547, 0.0
    %v600 = vadd.f32 %v598, %v599
    %v601 = vsel %vm62, %v548, 0.0
    %v602 = vadd.f32 %v600, %v601
    %v603 = vsel %vm62, %v549, 0.0
    %v604 = vadd.f32 %v602, %v603
    %v605 = vsel %vm62, %v550, 0.0
    %v606 = vadd.f32 %v604, %v605
    %v607 = vsel %vm62, %v551, 0.0
    %v608 = vadd.f32 %v606, %v607
    %v609 = vsel %vm62, %v552, 0.0
    %v610 = vadd.f32 %v608, %v609
    %v611 = vsel %vm62, %v553, 0.0
    %v612 = vadd.f32 %v610, %v611
    %v613 = vsel %vm62, %v554, 0.0
    %v614 = vadd.f32 %v612, %v613
    %v615 = vsel %vm62, %v555, 0.0
    %v616 = vadd.f32 %v614, %v615
    %v617 = vsel %vm62, %v556, 0.0
    %v618 = vadd.f32 %v616, %v617
    %v619 = vsel %vm62, %v557, 0.0
    %v620 = vadd.f32 %v618, %v619
    %v621 = vsel %vm62, %v558, 0.0
    %v622 = vadd.f32 %v620, %v621
    %v623 = vsel %vm62, %v559, 0.0
    %v624 = vadd.f32 %v622, %v623
    %v625 = vsel %vm62, %v560, 0.0
    %v626 = vadd.f32 %v624, %v625
    %v627 = vsel %vm62, %v561, 0.0
    %v628 = vadd.f32 %v626, %v627
    %v629 = vsel %vm62, %v562, 0.0
    %v630 = vadd.f32 %v628, %v629
    %v631 = vsel %vm62, %v563, 0.0
    %v632 = vadd.f32 %v630, %v631
    %v633 = vsel %vm62, %v564, 0.0
    %v634 = vadd.f32 %v632, %v633
    %v635 = vsel %vm62, %v565, 0.0
    %v636 = vadd.f32 %v634, %v635
    %v637 = vsel %vm62, %v566, 0.0
    %v638 = vadd.f32 %v636, %v637
    %v639 = vsel %vm62, %v567, 0.0
    %v640 = vadd.f32 %v638, %v639
    %v641 = vsel %vm62, %v568, 0.0
    %v642 = vadd.f32 %v640, %v641
    %v643 = vsel %vm62, %v569, 0.0
    %v644 = vadd.f32 %v642, %v643
    %v645 = vsel %vm62, %v570, 0.0
    %v646 = vadd.f32 %v644, %v645
    %v647 = vsel %vm62, %v571, 0.0
    %v648 = vadd.f32 %v646, %v647
    %v649 = vsel %vm62, %v572, 0.0
    %v650 = vadd.f32 %v648, %v649
    %v651 = vsel %vm62, %v573, 0.0
    %v652 = vadd.f32 %v650, %v651
    %v653 = vrot.slane %v652, 4
    %v654 = vadd.f32 %v652, %v653
    %v655 = vrot.slane %v654, 2
    %v656 = vadd.f32 %v654, %v655
    %v657 = vrot.slane %v656, 1
    %v658 = vadd.f32 %v656, %v657
    %v659 = vmul.f32 %v658, 0.005
    %v660 = vmul.f32 %v533, %v533
    %v661 = vsub.f32 %v659, %v660
    %v662 = vld [vmem:[%s3] sm:$0x1]
    %v663 = vadd.f32 %v661, 1e-05
    %v664 = vrsqrt.pop %v663
    %v665 = vmul.f32 %v662, %v664
    %v666 = vld [vmem:[%s3 + $0x1] sm:$0x1]
    %v667 = vmul.f32 %v533, %v665
    %v668 = vsub.f32 %v666, %v667
    %v669 = vlaneseq
    %v670 = vshrl.u32 %v669, 7
    %v671 = vsub.s32 0, %v670
    %v672 = vrot.slane %v665, %v671
    %v673 = vmul.f32 %v250, %v672
    %v674 = vmul.f32 %v255, %v672
    %v675 = vmul.f32 %v260, %v672
    %v676 = vmul.f32 %v265, %v672
    %v677 = vmul.f32 %v270, %v672
    %v678 = vmul.f32 %v275, %v672
    %v679 = vmul.f32 %v280, %v672
    %v680 = vmul.f32 %v285, %v672
    %v681 = vmul.f32 %v290, %v672
    %v682 = vmul.f32 %v295, %v672
    %v683 = vmul.f32 %v300, %v672
    %v684 = vmul.f32 %v305, %v672
    %v685 = vmul.f32 %v310, %v672
    %v686 = vmul.f32 %v315, %v672
    %v687 = vmul.f32 %v320, %v672
    %v688 = vmul.f32 %v325, %v672
    %v689 = vmul.f32 %v330, %v672
    %v690 = vmul.f32 %v335, %v672
    %v691 = vmul.f32 %v340, %v672
    %v692 = vmul.f32 %v345, %v672
    %v693 = vmul.f32 %v350, %v672
    %v694 = vmul.f32 %v355, %v672
    %v695 = vmul.f32 %v360, %v672
    %v696 = vmul.f32 %v365, %v672
    %v697 = vmul.f32 %v370, %v672
    %v698 = vmul.f32 %v375, %v672
    %v699 = vmul.f32 %v380, %v672
    %v700 = vmul.f32 %v385, %v672
    %v701 = vmul.f32 %v390, %v672
    %v702 = vmul.f32 %v395, %v672
    %v703 = vmul.f32 %v400, %v672
    %v704 = vmul.f32 %v405, %v672
    %v705 = vmul.f32 %v410, %v672
    %v706 = vmul.f32 %v415, %v672
    %v707 = vmul.f32 %v420, %v672
    %v708 = vmul.f32 %v425, %v672
    %v709 = vmul.f32 %v430, %v672
    %v710 = vmul.f32 %v435, %v672
    %v711 = vmul.f32 %v440, %v672
    %v712 = vmul.f32 %v445, %v672
    %v713 = vlaneseq
    %v714 = vshrl.u32 %v713, 7
    %v715 = vsub.s32 0, %v714
    %v716 = vrot.slane %v668, %v715
    %v717 = vadd.f32 %v673, %v716
    %v718 = vadd.f32 %v674, %v716
    %v719 = vadd.f32 %v675, %v716
    %v720 = vadd.f32 %v676, %v716
    %v721 = vadd.f32 %v677, %v716
    %v722 = vadd.f32 %v678, %v716
    %v723 = vadd.f32 %v679, %v716
    %v724 = vadd.f32 %v680, %v716
    %v725 = vadd.f32 %v681, %v716
    %v726 = vadd.f32 %v682, %v716
    %v727 = vadd.f32 %v683, %v716
    %v728 = vadd.f32 %v684, %v716
    %v729 = vadd.f32 %v685, %v716
    %v730 = vadd.f32 %v686, %v716
    %v731 = vadd.f32 %v687, %v716
    %v732 = vadd.f32 %v688, %v716
    %v733 = vadd.f32 %v689, %v716
    %v734 = vadd.f32 %v690, %v716
    %v735 = vadd.f32 %v691, %v716
    %v736 = vadd.f32 %v692, %v716
    %v737 = vadd.f32 %v693, %v716
    %v738 = vadd.f32 %v694, %v716
    %v739 = vadd.f32 %v695, %v716
    %v740 = vadd.f32 %v696, %v716
    %v741 = vadd.f32 %v697, %v716
    %v742 = vadd.f32 %v698, %v716
    %v743 = vadd.f32 %v699, %v716
    %v744 = vadd.f32 %v700, %v716
    %v745 = vadd.f32 %v701, %v716
    %v746 = vadd.f32 %v702, %v716
    %v747 = vadd.f32 %v703, %v716
    %v748 = vadd.f32 %v704, %v716
    %v749 = vadd.f32 %v705, %v716
    %v750 = vadd.f32 %v706, %v716
    %v751 = vadd.f32 %v707, %v716
    %v752 = vadd.f32 %v708, %v716
    %v753 = vadd.f32 %v709, %v716
    %v754 = vadd.f32 %v710, %v716
    %v755 = vadd.f32 %v711, %v716
    %v756 = vadd.f32 %v712, %v716
    %v757 = vmax.f32 %v717, 0.0
    %v758 = vmax.f32 %v718, 0.0
    %v759 = vmax.f32 %v719, 0.0
    %v760 = vmax.f32 %v720, 0.0
    %v761 = vmax.f32 %v721, 0.0
    %v762 = vmax.f32 %v722, 0.0
    %v763 = vmax.f32 %v723, 0.0
    %v764 = vmax.f32 %v724, 0.0
    %v765 = vmax.f32 %v725, 0.0
    %v766 = vmax.f32 %v726, 0.0
    %v767 = vmax.f32 %v727, 0.0
    %v768 = vmax.f32 %v728, 0.0
    %v769 = vmax.f32 %v729, 0.0
    %v770 = vmax.f32 %v730, 0.0
    %v771 = vmax.f32 %v731, 0.0
    %v772 = vmax.f32 %v732, 0.0
    %v773 = vmax.f32 %v733, 0.0
    %v774 = vmax.f32 %v734, 0.0
    %v775 = vmax.f32 %v735, 0.0
    %v776 = vmax.f32 %v736, 0.0
    %v777 = vmax.f32 %v737, 0.0
    %v778 = vmax.f32 %v738, 0.0
    %v779 = vmax.f32 %v739, 0.0
    %v780 = vmax.f32 %v740, 0.0
    %v781 = vmax.f32 %v741, 0.0
    %v782 = vmax.f32 %v742, 0.0
    %v783 = vmax.f32 %v743, 0.0
    %v784 = vmax.f32 %v744, 0.0
    %v785 = vmax.f32 %v745, 0.0
    %v786 = vmax.f32 %v746, 0.0
    %v787 = vmax.f32 %v747, 0.0
    %v788 = vmax.f32 %v748, 0.0
    %v789 = vmax.f32 %v749, 0.0
    %v790 = vmax.f32 %v750, 0.0
    %v791 = vmax.f32 %v751, 0.0
    %v792 = vmax.f32 %v752, 0.0
    %v793 = vmax.f32 %v753, 0.0
    %v794 = vmax.f32 %v754, 0.0
    %v795 = vmax.f32 %v755, 0.0
    %v796 = vmax.f32 %v756, 0.0
    %797 = vst.msk [vmem:[#allocation2] sm:$0xff] %vm62, %v757
    %798 = vst.msk [vmem:[#allocation2 + $0x8] sm:$0xff] %vm62, %v758
    %799 = vst.msk [vmem:[#allocation2 + $0x10] sm:$0xff] %vm62, %v759
    %800 = vst.msk [vmem:[#allocation2 + $0x18] sm:$0xff] %vm62, %v760
    %801 = vst.msk [vmem:[#allocation2 + $0x20] sm:$0xff] %vm62, %v761
    %802 = vst.msk [vmem:[#allocation2 + $0x28] sm:$0xff] %vm62, %v762
    %803 = vst.msk [vmem:[#allocation2 + $0x30] sm:$0xff] %vm62, %v763
    %804 = vst.msk [vmem:[#allocation2 + $0x38] sm:$0xff] %vm62, %v764
    %805 = vst.msk [vmem:[#allocation2 + $0x40] sm:$0xff] %vm62, %v765
    %806 = vst.msk [vmem:[#allocation2 + $0x48] sm:$0xff] %vm62, %v766
    %807 = vst.msk [vmem:[#allocation2 + $0x50] sm:$0xff] %vm62, %v767
    %808 = vst.msk [vmem:[#allocation2 + $0x58] sm:$0xff] %vm62, %v768
    %809 = vst.msk [vmem:[#allocation2 + $0x60] sm:$0xff] %vm62, %v769
    %810 = vst.msk [vmem:[#allocation2 + $0x68] sm:$0xff] %vm62, %v770
    %811 = vst.msk [vmem:[#allocation2 + $0x70] sm:$0xff] %vm62, %v771
    %812 = vst.msk [vmem:[#allocation2 + $0x78] sm:$0xff] %vm62, %v772
    %813 = vst.msk [vmem:[#allocation2 + $0x80] sm:$0xff] %vm62, %v773
    %814 = vst.msk [vmem:[#allocation2 + $0x88] sm:$0xff] %vm62, %v774
    %815 = vst.msk [vmem:[#allocation2 + $0x90] sm:$0xff] %vm62, %v775
    %816 = vst.msk [vmem:[#allocation2 + $0x98] sm:$0xff] %vm62, %v776
    %817 = vst.msk [vmem:[#allocation2 + $0xa0] sm:$0xff] %vm62, %v777
    %818 = vst.msk [vmem:[#allocation2 + $0xa8] sm:$0xff] %vm62, %v778
    %819 = vst.msk [vmem:[#allocation2 + $0xb0] sm:$0xff] %vm62, %v779
    %820 = vst.msk [vmem:[#allocation2 + $0xb8] sm:$0xff] %vm62, %v780
    %821 = vst.msk [vmem:[#allocation2 + $0xc0] sm:$0xff] %vm62, %v781
    %822 = vst.msk [vmem:[#allocation2 + $0xc8] sm:$0xff] %vm62, %v782
    %823 = vst.msk [vmem:[#allocation2 + $0xd0] sm:$0xff] %vm62, %v783
    %824 = vst.msk [vmem:[#allocation2 + $0xd8] sm:$0xff] %vm62, %v784
    %825 = vst.msk [vmem:[#allocation2 + $0xe0] sm:$0xff] %vm62, %v785
    %826 = vst.msk [vmem:[#allocation2 + $0xe8] sm:$0xff] %vm62, %v786
    %827 = vst.msk [vmem:[#allocation2 + $0xf0] sm:$0xff] %vm62, %v787
    %828 = vst.msk [vmem:[#allocation2 + $0xf8] sm:$0xff] %vm62, %v788
    %829 = vst.msk [vmem:[#allocation2 + $0x100] sm:$0xff] %vm62, %v789
    %830 = vst.msk [vmem:[#allocation2 + $0x108] sm:$0xff] %vm62, %v790
    %831 = vst.msk [vmem:[#allocation2 + $0x110] sm:$0xff] %vm62, %v791
    %832 = vst.msk [vmem:[#allocation2 + $0x118] sm:$0xff] %vm62, %v792
    %833 = vst.msk [vmem:[#allocation2 + $0x120] sm:$0xff] %vm62, %v793
    %834 = vst.msk [vmem:[#allocation2 + $0x128] sm:$0xff] %vm62, %v794
    %835 = vst.msk [vmem:[#allocation2 + $0x130] sm:$0xff] %vm62, %v795
    %836 = vst.msk [vmem:[#allocation2 + $0x138] sm:$0xff] %vm62, %v796
    %v837 = vld [vmem:[#allocation2] sm:$0xff]
    %v838 = vld [vmem:[#allocation2 + $0x10] sm:$0xff]
    %v839 = vld [vmem:[#allocation2 + $0x20] sm:$0xff]
    %v840 = vld [vmem:[#allocation2 + $0x30] sm:$0xff]
    %v841 = vld [vmem:[#allocation2 + $0x40] sm:$0xff]
    %v842 = vld [vmem:[#allocation2 + $0x50] sm:$0xff]
    %v843 = vld [vmem:[#allocation2 + $0x60] sm:$0xff]
    %v844 = vld [vmem:[#allocation2 + $0x70] sm:$0xff]
    %v845 = vld [vmem:[#allocation2 + $0xa0] sm:$0xff]
    %v846 = vld [vmem:[#allocation2 + $0xb0] sm:$0xff]
    %v847 = vld [vmem:[#allocation2 + $0xc0] sm:$0xff]
    %v848 = vld [vmem:[#allocation2 + $0xd0] sm:$0xff]
    %v849 = vld [vmem:[#allocation2 + $0xe0] sm:$0xff]
    %v850 = vld [vmem:[#allocation2 + $0xf0] sm:$0xff]
    %v851 = vld [vmem:[#allocation2 + $0x100] sm:$0xff]
    %v852 = vld [vmem:[#allocation2 + $0x110] sm:$0xff]
    %v853 = vld [vmem:[#allocation2 + $0x1] sm:$0xff]
    %v854 = vld [vmem:[#allocation2 + $0x11] sm:$0xff]
    %v855 = vld [vmem:[#allocation2 + $0x21] sm:$0xff]
    %v856 = vld [vmem:[#allocation2 + $0x31] sm:$0xff]
    %v857 = vld [vmem:[#allocation2 + $0x41] sm:$0xff]
    %v858 = vld [vmem:[#allocation2 + $0x51] sm:$0xff]
    %v859 = vld [vmem:[#allocation2 + $0x61] sm:$0xff]
    %v860 = vld [vmem:[#allocation2 + $0x71] sm:$0xff]
    %v861 = vld [vmem:[#allocation2 + $0xa1] sm:$0xff]
    %v862 = vld [vmem:[#allocation2 + $0xb1] sm:$0xff]
    %v863 = vld [vmem:[#allocation2 + $0xc1] sm:$0xff]
    %v864 = vld [vmem:[#allocation2 + $0xd1] sm:$0xff]
    %v865 = vld [vmem:[#allocation2 + $0xe1] sm:$0xff]
    %v866 = vld [vmem:[#allocation2 + $0xf1] sm:$0xff]
    %v867 = vld [vmem:[#allocation2 + $0x101] sm:$0xff]
    %v868 = vld [vmem:[#allocation2 + $0x111] sm:$0xff]
    %v869 = vld [vmem:[#allocation2 + $0x2] sm:$0xff]
    %v870 = vld [vmem:[#allocation2 + $0x12] sm:$0xff]
    %v871 = vld [vmem:[#allocation2 + $0x22] sm:$0xff]
    %v872 = vld [vmem:[#allocation2 + $0x32] sm:$0xff]
    %v873 = vld [vmem:[#allocation2 + $0x42] sm:$0xff]
    %v874 = vld [vmem:[#allocation2 + $0x52] sm:$0xff]
    %v875 = vld [vmem:[#allocation2 + $0x62] sm:$0xff]
    %v876 = vld [vmem:[#allocation2 + $0x72] sm:$0xff]
    %v877 = vld [vmem:[#allocation2 + $0xa2] sm:$0xff]
    %v878 = vld [vmem:[#allocation2 + $0xb2] sm:$0xff]
    %v879 = vld [vmem:[#allocation2 + $0xc2] sm:$0xff]
    %v880 = vld [vmem:[#allocation2 + $0xd2] sm:$0xff]
    %v881 = vld [vmem:[#allocation2 + $0xe2] sm:$0xff]
    %v882 = vld [vmem:[#allocation2 + $0xf2] sm:$0xff]
    %v883 = vld [vmem:[#allocation2 + $0x102] sm:$0xff]
    %v884 = vld [vmem:[#allocation2 + $0x112] sm:$0xff]
    %901 = vrot.lane.b32.xlu0 %v853, 32
    %v902 = vpop.permute.xlu0 %901
    %903 = vrot.lane.b32.xlu0 %v854, 32
    %v904 = vpop.permute.xlu0 %903
    %905 = vrot.lane.b32.xlu0 %v855, 32
    %v906 = vpop.permute.xlu0 %905
    %907 = vrot.lane.b32.xlu0 %v856, 32
    %v908 = vpop.permute.xlu0 %907
    %909 = vrot.lane.b32.xlu0 %v857, 32
    %v910 = vpop.permute.xlu0 %909
    %911 = vrot.lane.b32.xlu0 %v858, 32
    %v912 = vpop.permute.xlu0 %911
    %913 = vrot.lane.b32.xlu0 %v859, 32
    %v914 = vpop.permute.xlu0 %913
    %915 = vrot.lane.b32.xlu0 %v860, 32
    %v916 = vpop.permute.xlu0 %915
    %917 = vrot.lane.b32.xlu0 %v861, 32
    %v918 = vpop.permute.xlu0 %917
    %919 = vrot.lane.b32.xlu0 %v862, 32
    %v920 = vpop.permute.xlu0 %919
    %921 = vrot.lane.b32.xlu0 %v863, 32
    %v922 = vpop.permute.xlu0 %921
    %923 = vrot.lane.b32.xlu0 %v864, 32
    %v924 = vpop.permute.xlu0 %923
    %925 = vrot.lane.b32.xlu0 %v865, 32
    %v926 = vpop.permute.xlu0 %925
    %927 = vrot.lane.b32.xlu0 %v866, 32
    %v928 = vpop.permute.xlu0 %927
    %929 = vrot.lane.b32.xlu0 %v867, 32
    %v930 = vpop.permute.xlu0 %929
    %931 = vrot.lane.b32.xlu0 %v868, 32
    %v932 = vpop.permute.xlu0 %931
    %965 = vrot.lane.b32.xlu0 %v869, 64
    %v966 = vpop.permute.xlu0 %965
    %967 = vrot.lane.b32.xlu0 %v870, 64
    %v968 = vpop.permute.xlu0 %967
    %969 = vrot.lane.b32.xlu0 %v871, 64
    %v970 = vpop.permute.xlu0 %969
    %971 = vrot.lane.b32.xlu0 %v872, 64
    %v972 = vpop.permute.xlu0 %971
    %973 = vrot.lane.b32.xlu0 %v873, 64
    %v974 = vpop.permute.xlu0 %973
    %975 = vrot.lane.b32.xlu0 %v874, 64
    %v976 = vpop.permute.xlu0 %975
    %977 = vrot.lane.b32.xlu0 %v875, 64
    %v978 = vpop.permute.xlu0 %977
    %979 = vrot.lane.b32.xlu0 %v876, 64
    %v980 = vpop.permute.xlu0 %979
    %981 = vrot.lane.b32.xlu0 %v877, 64
    %v982 = vpop.permute.xlu0 %981
    %983 = vrot.lane.b32.xlu0 %v878, 64
    %v984 = vpop.permute.xlu0 %983
    %985 = vrot.lane.b32.xlu0 %v879, 64
    %v986 = vpop.permute.xlu0 %985
    %987 = vrot.lane.b32.xlu0 %v880, 64
    %v988 = vpop.permute.xlu0 %987
    %989 = vrot.lane.b32.xlu0 %v881, 64
    %v990 = vpop.permute.xlu0 %989
    %991 = vrot.lane.b32.xlu0 %v882, 64
    %v992 = vpop.permute.xlu0 %991
    %993 = vrot.lane.b32.xlu0 %v883, 64
    %v994 = vpop.permute.xlu0 %993
    %995 = vrot.lane.b32.xlu0 %v884, 64
    %v996 = vpop.permute.xlu0 %995
    %v1013 = vsel %vm62, %v837, %v902
    %v1014 = vsel %vm62, %v838, %v904
    %v1015 = vsel %vm62, %v839, %v906
    %v1016 = vsel %vm62, %v840, %v908
    %v1017 = vsel %vm62, %v841, %v910
    %v1018 = vsel %vm62, %v842, %v912
    %v1019 = vsel %vm62, %v843, %v914
    %v1020 = vsel %vm62, %v844, %v916
    %v1021 = vsel %vm62, %v845, %v918
    %v1022 = vsel %vm62, %v846, %v920
    %v1023 = vsel %vm62, %v847, %v922
    %v1024 = vsel %vm62, %v848, %v924
    %v1025 = vsel %vm62, %v849, %v926
    %v1026 = vsel %vm62, %v850, %v928
    %v1027 = vsel %vm62, %v851, %v930
    %v1028 = vsel %vm62, %v852, %v932
    %vm1029 = vcmask 523264
    %v1030 = vsel %vm1029, %v1013, %v966
    %v1031 = vsel %vm1029, %v1014, %v968
    %v1032 = vsel %vm1029, %v1015, %v970
    %v1033 = vsel %vm1029, %v1016, %v972
    %v1034 = vsel %vm1029, %v1017, %v974
    %v1035 = vsel %vm1029, %v1018, %v976
    %v1036 = vsel %vm1029, %v1019, %v978
    %v1037 = vsel %vm1029, %v1020, %v980
    %v1038 = vsel %vm1029, %v1021, %v982
    %v1039 = vsel %vm1029, %v1022, %v984
    %v1040 = vsel %vm1029, %v1023, %v986
    %v1041 = vsel %vm1029, %v1024, %v988
    %v1042 = vsel %vm1029, %v1025, %v990
    %v1043 = vsel %vm1029, %v1026, %v992
    %v1044 = vsel %vm1029, %v1027, %v994
    %v1045 = vsel %vm1029, %v1028, %v996
    %v1046 = vld [vmem:[%s2] sm:$0xff]
    %v1047 = vld [vmem:[%s2 + $0x8] sm:$0xff]
    %v1048 = vld [vmem:[%s2 + $0x10] sm:$0xff]
    %v1049 = vld [vmem:[%s2 + $0x18] sm:$0xff]
    %v1050 = vld [vmem:[%s2 + $0x20] sm:$0xff]
    %v1051 = vld [vmem:[%s2 + $0x28] sm:$0xff]
    %v1052 = vld [vmem:[%s2 + $0x30] sm:$0xff]
    %v1053 = vld [vmem:[%s2 + $0x38] sm:$0xff]
    %v1054 = vld [vmem:[%s2 + $0x40] sm:$0xff]
    %v1055 = vld [vmem:[%s2 + $0x48] sm:$0xff]
    %v1056 = vld [vmem:[%s2 + $0x50] sm:$0xff]
    %v1057 = vld [vmem:[%s2 + $0x58] sm:$0xff]
    %s1058 = scalar_lea.vmem [#allocation2], 16
    %v1059 = vld [vmem:[%s1058] sm:$0xff]
    %v1060 = vld [vmem:[%s1058 + $0x10] sm:$0xff]
    %v1061 = vld [vmem:[%s1058 + $0x20] sm:$0xff]
    %v1062 = vld [vmem:[%s1058 + $0x30] sm:$0xff]
    %v1063 = vld [vmem:[%s1058 + $0x40] sm:$0xff]
    %v1064 = vld [vmem:[%s1058 + $0x50] sm:$0xff]
    %v1065 = vld [vmem:[%s1058 + $0x60] sm:$0xff]
    %v1066 = vld [vmem:[%s1058 + $0x70] sm:$0xff]
    %v1067 = vld [vmem:[%s1058 + $0xa0] sm:$0xff]
    %v1068 = vld [vmem:[%s1058 + $0xb0] sm:$0xff]
    %v1069 = vld [vmem:[%s1058 + $0xc0] sm:$0xff]
    %v1070 = vld [vmem:[%s1058 + $0xd0] sm:$0xff]
    %v1071 = vld [vmem:[%s1058 + $0xe0] sm:$0xff]
    %v1072 = vld [vmem:[%s1058 + $0xf0] sm:$0xff]
    %v1073 = vld [vmem:[%s1058 + $0x100] sm:$0xff]
    %v1074 = vld [vmem:[%s1058 + $0x110] sm:$0xff]
    %v1075 = vld [vmem:[%s1058 + $0x1] sm:$0xff]
    %v1076 = vld [vmem:[%s1058 + $0x11] sm:$0xff]
    %v1077 = vld [vmem:[%s1058 + $0x21] sm:$0xff]
    %v1078 = vld [vmem:[%s1058 + $0x31] sm:$0xff]
    %v1079 = vld [vmem:[%s1058 + $0x41] sm:$0xff]
    %v1080 = vld [vmem:[%s1058 + $0x51] sm:$0xff]
    %v1081 = vld [vmem:[%s1058 + $0x61] sm:$0xff]
    %v1082 = vld [vmem:[%s1058 + $0x71] sm:$0xff]
    %v1083 = vld [vmem:[%s1058 + $0xa1] sm:$0xff]
    %v1084 = vld [vmem:[%s1058 + $0xb1] sm:$0xff]
    %v1085 = vld [vmem:[%s1058 + $0xc1] sm:$0xff]
    %v1086 = vld [vmem:[%s1058 + $0xd1] sm:$0xff]
    %v1087 = vld [vmem:[%s1058 + $0xe1] sm:$0xff]
    %v1088 = vld [vmem:[%s1058 + $0xf1] sm:$0xff]
    %v1089 = vld [vmem:[%s1058 + $0x101] sm:$0xff]
    %v1090 = vld [vmem:[%s1058 + $0x111] sm:$0xff]
    %v1091 = vld [vmem:[%s1058 + $0x2] sm:$0xff]
    %v1092 = vld [vmem:[%s1058 + $0x12] sm:$0xff]
    %v1093 = vld [vmem:[%s1058 + $0x22] sm:$0xff]
    %v1094 = vld [vmem:[%s1058 + $0x32] sm:$0xff]
    %v1095 = vld [vmem:[%s1058 + $0x42] sm:$0xff]
    %v1096 = vld [vmem:[%s1058 + $0x52] sm:$0xff]
    %v1097 = vld [vmem:[%s1058 + $0x62] sm:$0xff]
    %v1098 = vld [vmem:[%s1058 + $0x72] sm:$0xff]
    %v1099 = vld [vmem:[%s1058 + $0xa2] sm:$0xff]
    %v1100 = vld [vmem:[%s1058 + $0xb2] sm:$0xff]
    %v1101 = vld [vmem:[%s1058 + $0xc2] sm:$0xff]
    %v1102 = vld [vmem:[%s1058 + $0xd2] sm:$0xff]
    %v1103 = vld [vmem:[%s1058 + $0xe2] sm:$0xff]
    %v1104 = vld [vmem:[%s1058 + $0xf2] sm:$0xff]
    %v1105 = vld [vmem:[%s1058 + $0x102] sm:$0xff]
    %v1106 = vld [vmem:[%s1058 + $0x112] sm:$0xff]
    %1123 = vrot.lane.b32.xlu0 %v1075, 32
    %v1124 = vpop.permute.xlu0 %1123
    %1125 = vrot.lane.b32.xlu0 %v1076, 32
    %v1126 = vpop.permute.xlu0 %1125
    %1127 = vrot.lane.b32.xlu0 %v1077, 32
    %v1128 = vpop.permute.xlu0 %1127
    %1129 = vrot.lane.b32.xlu0 %v1078, 32
    %v1130 = vpop.permute.xlu0 %1129
    %1131 = vrot.lane.b32.xlu0 %v1079, 32
    %v1132 = vpop.permute.xlu0 %1131
    %1133 = vrot.lane.b32.xlu0 %v1080, 32
    %v1134 = vpop.permute.xlu0 %1133
    %1135 = vrot.lane.b32.xlu0 %v1081, 32
    %v1136 = vpop.permute.xlu0 %1135
    %1137 = vrot.lane.b32.xlu0 %v1082, 32
    %v1138 = vpop.permute.xlu0 %1137
    %1139 = vrot.lane.b32.xlu0 %v1083, 32
    %v1140 = vpop.permute.xlu0 %1139
    %1141 = vrot.lane.b32.xlu0 %v1084, 32
    %v1142 = vpop.permute.xlu0 %1141
    %1143 = vrot.lane.b32.xlu0 %v1085, 32
    %v1144 = vpop.permute.xlu0 %1143
    %1145 = vrot.lane.b32.xlu0 %v1086, 32
    %v1146 = vpop.permute.xlu0 %1145
    %1147 = vrot.lane.b32.xlu0 %v1087, 32
    %v1148 = vpop.permute.xlu0 %1147
    %1149 = vrot.lane.b32.xlu0 %v1088, 32
    %v1150 = vpop.permute.xlu0 %1149
    %1151 = vrot.lane.b32.xlu0 %v1089, 32
    %v1152 = vpop.permute.xlu0 %1151
    %1153 = vrot.lane.b32.xlu0 %v1090, 32
    %v1154 = vpop.permute.xlu0 %1153
    %1187 = vrot.lane.b32.xlu0 %v1091, 64
    %v1188 = vpop.permute.xlu0 %1187
    %1189 = vrot.lane.b32.xlu0 %v1092, 64
    %v1190 = vpop.permute.xlu0 %1189
    %1191 = vrot.lane.b32.xlu0 %v1093, 64
    %v1192 = vpop.permute.xlu0 %1191
    %1193 = vrot.lane.b32.xlu0 %v1094, 64
    %v1194 = vpop.permute.xlu0 %1193
    %1195 = vrot.lane.b32.xlu0 %v1095, 64
    %v1196 = vpop.permute.xlu0 %1195
    %1197 = vrot.lane.b32.xlu0 %v1096, 64
    %v1198 = vpop.permute.xlu0 %1197
    %1199 = vrot.lane.b32.xlu0 %v1097, 64
    %v1200 = vpop.permute.xlu0 %1199
    %1201 = vrot.lane.b32.xlu0 %v1098, 64
    %v1202 = vpop.permute.xlu0 %1201
    %1203 = vrot.lane.b32.xlu0 %v1099, 64
    %v1204 = vpop.permute.xlu0 %1203
    %1205 = vrot.lane.b32.xlu0 %v1100, 64
    %v1206 = vpop.permute.xlu0 %1205
    %1207 = vrot.lane.b32.xlu0 %v1101, 64
    %v1208 = vpop.permute.xlu0 %1207
    %1209 = vrot.lane.b32.xlu0 %v1102, 64
    %v1210 = vpop.permute.xlu0 %1209
    %1211 = vrot.lane.b32.xlu0 %v1103, 64
    %v1212 = vpop.permute.xlu0 %1211
    %1213 = vrot.lane.b32.xlu0 %v1104, 64
    %v1214 = vpop.permute.xlu0 %1213
    %1215 = vrot.lane.b32.xlu0 %v1105, 64
    %v1216 = vpop.permute.xlu0 %1215
    %1217 = vrot.lane.b32.xlu0 %v1106, 64
    %v1218 = vpop.permute.xlu0 %1217
    %v1235 = vsel %vm62, %v1059, %v1124
    %v1236 = vsel %vm62, %v1060, %v1126
    %v1237 = vsel %vm62, %v1061, %v1128
    %v1238 = vsel %vm62, %v1062, %v1130
    %v1239 = vsel %vm62, %v1063, %v1132
    %v1240 = vsel %vm62, %v1064, %v1134
    %v1241 = vsel %vm62, %v1065, %v1136
    %v1242 = vsel %vm62, %v1066, %v1138
    %v1243 = vsel %vm62, %v1067, %v1140
    %v1244 = vsel %vm62, %v1068, %v1142
    %v1245 = vsel %vm62, %v1069, %v1144
    %v1246 = vsel %vm62, %v1070, %v1146
    %v1247 = vsel %vm62, %v1071, %v1148
    %v1248 = vsel %vm62, %v1072, %v1150
    %v1249 = vsel %vm62, %v1073, %v1152
    %v1250 = vsel %vm62, %v1074, %v1154
    %v1251 = vsel %vm1029, %v1235, %v1188
    %v1252 = vsel %vm1029, %v1236, %v1190
    %v1253 = vsel %vm1029, %v1237, %v1192
    %v1254 = vsel %vm1029, %v1238, %v1194
    %v1255 = vsel %vm1029, %v1239, %v1196
    %v1256 = vsel %vm1029, %v1240, %v1198
    %v1257 = vsel %vm1029, %v1241, %v1200
    %v1258 = vsel %vm1029, %v1242, %v1202
    %v1259 = vsel %vm1029, %v1243, %v1204
    %v1260 = vsel %vm1029, %v1244, %v1206
    %v1261 = vsel %vm1029, %v1245, %v1208
    %v1262 = vsel %vm1029, %v1246, %v1210
    %v1263 = vsel %vm1029, %v1247, %v1212
    %v1264 = vsel %vm1029, %v1248, %v1214
    %v1265 = vsel %vm1029, %v1249, %v1216
    %v1266 = vsel %vm1029, %v1250, %v1218
    %s1267 = scalar_lea.vmem %s2, 96
    %v1268 = vld [vmem:[%s1267] sm:$0xff]
    %v1269 = vld [vmem:[%s1267 + $0x8] sm:$0xff]
    %v1270 = vld [vmem:[%s1267 + $0x10] sm:$0xff]
    %v1271 = vld [vmem:[%s1267 + $0x18] sm:$0xff]
    %v1272 = vld [vmem:[%s1267 + $0x20] sm:$0xff]
    %v1273 = vld [vmem:[%s1267 + $0x28] sm:$0xff]
    %v1274 = vld [vmem:[%s1267 + $0x30] sm:$0xff]
    %v1275 = vld [vmem:[%s1267 + $0x38] sm:$0xff]
    %v1276 = vld [vmem:[%s1267 + $0x40] sm:$0xff]
    %v1277 = vld [vmem:[%s1267 + $0x48] sm:$0xff]
    %v1278 = vld [vmem:[%s1267 + $0x50] sm:$0xff]
    %v1279 = vld [vmem:[%s1267 + $0x58] sm:$0xff]
    %vm1280 = vcmask 785408
    %v1282 = vsel %vm1280, %v1251, 0
    %v1285 = vsel %vm1280, %v1252, 0
    %v1288 = vsel %vm1280, %v1253, 0
    %v1291 = vsel %vm1280, %v1254, 0
    %v1294 = vsel %vm1280, %v1255, 0
    %v1297 = vsel %vm1280, %v1256, 0
    %v1300 = vsel %vm1280, %v1257, 0
    %v1303 = vsel %vm1280, %v1258, 0
    %v1306 = vsel %vm1280, %v1259, 0
    %v1309 = vsel %vm1280, %v1260, 0
    %v1312 = vsel %vm1280, %v1261, 0
    %v1315 = vsel %vm1280, %v1262, 0
    %v1318 = vsel %vm1280, %v1263, 0
    %v1321 = vsel %vm1280, %v1264, 0
    %v1324 = vsel %vm1280, %v1265, 0
    %v1327 = vsel %vm1280, %v1266, 0
    %1329 = vmatprep.subr.mxu0 0.0
    %1330 = vmatpush1.msra.mxu0 %v1268
    %1331 = vmatprep.subr.mxu0 0.0
    %1332 = vmatpush1.msra.mxu0 %v1269
    %1333 = vmatprep.subr.mxu0 0.0
    %1334 = vmatpush1.msra.mxu0 %v1270
    %1335 = vmatprep.subr.mxu0 0.0
    %1336 = vmatpush1.msra.mxu0 %v1271
    %1337 = vmatprep.subr.mxu0 0.0
    %1338 = vmatpush1.msra.mxu0 %v1272
    %1339 = vmatprep.subr.mxu0 0.0
    %1340 = vmatpush1.msra.mxu0 %v1273
    %1341 = vmatprep.subr.mxu0 0.0
    %1342 = vmatpush1.msra.mxu0 %v1274
    %1343 = vmatprep.subr.mxu0 0.0
    %1344 = vmatpush1.msra.mxu0 %v1275
    %1345 = vmatprep.subr.mxu0 0.0
    %1346 = vmatpush1.msra.mxu0 %v1276
    %1347 = vmatprep.subr.mxu0 0.0
    %1348 = vmatpush1.msra.mxu0 %v1277
    %1349 = vmatprep.subr.mxu0 0.0
    %1350 = vmatpush1.msra.mxu0 %v1278
    %1351 = vmatprep.subr.mxu0 0.0
    %1352 = vmatpush1.msra.mxu0 %v1279
    %1353 = vmatprep.subr.mxu0 0.0
    %1354 = vmatpush1.msra.mxu0 0.0
    %1355 = vmatprep.subr.mxu0 0.0
    %1356 = vmatpush1.msra.mxu0 0.0
    %1357 = vmatprep.subr.mxu0 0.0
    %1358 = vmatpush1.msra.mxu0 0.0
    %1359 = vmatprep.subr.mxu0 0.0
    %1360 = vmatpush1.msra.mxu0 0.0
    %1361 = vmatprep.subr.mxu0 0.0
    %1362 = vmatpush1.msra.mxu0 0.0
    %1363 = vmatprep.subr.mxu0 0.0
    %1364 = vmatpush1.msra.mxu0 0.0
    %1365 = vmatprep.subr.mxu0 0.0
    %1366 = vmatpush1.msra.mxu0 0.0
    %1367 = vmatprep.subr.mxu0 0.0
    %1368 = vmatpush1.msra.mxu0 0.0
    %1369 = vmatprep.subr.mxu0 0.0
    %1370 = vmatpush1.msra.mxu0 0.0
    %1371 = vmatprep.subr.mxu0 0.0
    %1372 = vmatpush1.msra.mxu0 0.0
    %1373 = vmatprep.subr.mxu0 0.0
    %1374 = vmatpush1.msra.mxu0 0.0
    %1375 = vmatprep.subr.mxu0 0.0
    %1376 = vmatpush1.msra.mxu0 0.0
    %1377 = vmatprep.subr.mxu0 0.0
    %1378 = vmatpush1.msra.mxu0 0.0
    %1379 = vmatprep.subr.mxu0 0.0
    %1380 = vmatpush1.msra.mxu0 0.0
    %1381 = vmatprep.subr.mxu0 0.0
    %1382 = vmatpush1.msra.mxu0 0.0
    %1383 = vmatprep.subr.mxu0 0.0
    %1384 = vmatpush1.msra.mxu0 0.0
    %1385 = vmatprep.subr.mxu0 0.0
    %1386 = vmatpush1.msra.mxu0 0.0
    %1387 = vmatprep.subr.mxu0 0.0
    %1388 = vmatpush1.msra.mxu0 0.0
    %1389 = vmatprep.subr.mxu0 0.0
    %1390 = vmatpush1.msra.mxu0 0.0
    %1391 = vmatprep.subr.mxu0 0.0
    %1392 = vmatpush1.msra.mxu0 0.0
    %1393 = vmatprep.mubr.f32.mxu0 0.0
    %1394 = vmatmul.mubr.f32.gmra.mrb[0].mxu0 %v1282
    %v1395 = vpop.f32.mrb[0].mxu0
    %v1396 = vadd.f32 0.0, %v1395
    %v1397 = vpop.f32.mrb[0].mxu0
    %1398 = vmatprep.mubr.f32.mxu0 0.0
    %1399 = vmatmul.mubr.f32.gmra.mrb[0].mxu0 %v1285
    %v1400 = vpop.f32.mrb[0].mxu0
    %v1401 = vadd.f32 0.0, %v1400
    %v1402 = vpop.f32.mrb[0].mxu0
    %1403 = vmatprep.mubr.f32.mxu0 0.0
    %1404 = vmatmul.mubr.f32.gmra.mrb[0].mxu0 %v1288
    %v1405 = vpop.f32.mrb[0].mxu0
    %v1406 = vadd.f32 0.0, %v1405
    %v1407 = vpop.f32.mrb[0].mxu0
    %1408 = vmatprep.mubr.f32.mxu0 0.0
    %1409 = vmatmul.mubr.f32.gmra.mrb[0].mxu0 %v1291
    %v1410 = vpop.f32.mrb[0].mxu0
    %v1411 = vadd.f32 0.0, %v1410
    %v1412 = vpop.f32.mrb[0].mxu0
    %1413 = vmatprep.mubr.f32.mxu0 0.0
    %1414 = vmatmul.mubr.f32.gmra.mrb[0].mxu0 %v1294
    %v1415 = vpop.f32.mrb[0].mxu0
    %v1416 = vadd.f32 0.0, %v1415
    %v1417 = vpop.f32.mrb[0].mxu0
    %1418 = vmatprep.mubr.f32.mxu0 0.0
    %1419 = vmatmul.mubr.f32.gmra.mrb[0].mxu0 %v1297
    %v1420 = vpop.f32.mrb[0].mxu0
    %v1421 = vadd.f32 0.0, %v1420
    %v1422 = vpop.f32.mrb[0].mxu0
    %1423 = vmatprep.mubr.f32.mxu0 0.0
    %1424 = vmatmul.mubr.f32.gmra.mrb[0].mxu0 %v1300
    %v1425 = vpop.f32.mrb[0].mxu0
    %v1426 = vadd.f32 0.0, %v1425
    %v1427 = vpop.f32.mrb[0].mxu0
    %1428 = vmatprep.mubr.f32.mxu0 0.0
    %1429 = vmatmul.mubr.f32.gmra.mrb[0].mxu0 %v1303
    %v1430 = vpop.f32.mrb[0].mxu0
    %v1431 = vadd.f32 0.0, %v1430
    %v1432 = vpop.f32.mrb[0].mxu0
    %1433 = vmatprep.mubr.f32.mxu0 0.0
    %1434 = vmatmul.mubr.f32.gmra.mrb[0].mxu0 %v1306
    %v1435 = vpop.f32.mrb[0].mxu0
    %v1436 = vadd.f32 0.0, %v1435
    %v1437 = vpop.f32.mrb[0].mxu0
    %1438 = vmatprep.mubr.f32.mxu0 0.0
    %1439 = vmatmul.mubr.f32.gmra.mrb[0].mxu0 %v1309
    %v1440 = vpop.f32.mrb[0].mxu0
    %v1441 = vadd.f32 0.0, %v1440
    %v1442 = vpop.f32.mrb[0].mxu0
    %1443 = vmatprep.mubr.f32.mxu0 0.0
    %1444 = vmatmul.mubr.f32.gmra.mrb[0].mxu0 %v1312
    %v1445 = vpop.f32.mrb[0].mxu0
    %v1446 = vadd.f32 0.0, %v1445
    %v1447 = vpop.f32.mrb[0].mxu0
    %1448 = vmatprep.mubr.f32.mxu0 0.0
    %1449 = vmatmul.mubr.f32.gmra.mrb[0].mxu0 %v1315
    %v1450 = vpop.f32.mrb[0].mxu0
    %v1451 = vadd.f32 0.0, %v1450
    %v1452 = vpop.f32.mrb[0].mxu0
    %1453 = vmatprep.mubr.f32.mxu0 0.0
    %1454 = vmatmul.mubr.f32.gmra.mrb[0].mxu0 %v1318
    %v1455 = vpop.f32.mrb[0].mxu0
    %v1456 = vadd.f32 0.0, %v1455
    %v1457 = vpop.f32.mrb[0].mxu0
    %1458 = vmatprep.mubr.f32.mxu0 0.0
    %1459 = vmatmul.mubr.f32.gmra.mrb[0].mxu0 %v1321
    %v1460 = vpop.f32.mrb[0].mxu0
    %v1461 = vadd.f32 0.0, %v1460
    %v1462 = vpop.f32.mrb[0].mxu0
    %1463 = vmatprep.mubr.f32.mxu0 0.0
    %1464 = vmatmul.mubr.f32.gmra.mrb[0].mxu0 %v1324
    %v1465 = vpop.f32.mrb[0].mxu0
    %v1466 = vadd.f32 0.0, %v1465
    %v1467 = vpop.f32.mrb[0].mxu0
    %1468 = vmatprep.mubr.f32.mxu0 0.0
    %1469 = vmatmul.mubr.f32.gmra.mrb[0].mxu0 %v1327
    %v1470 = vpop.f32.mrb[0].mxu0
    %v1471 = vadd.f32 0.0, %v1470
    %v1472 = vpop.f32.mrb[0].mxu0
    %1473 = vdwg.mxu0
    %v1475 = vsel %vm1280, %v1030, 0
    %v1478 = vsel %vm1280, %v1031, 0
    %v1481 = vsel %vm1280, %v1032, 0
    %v1484 = vsel %vm1280, %v1033, 0
    %v1487 = vsel %vm1280, %v1034, 0
    %v1490 = vsel %vm1280, %v1035, 0
    %v1493 = vsel %vm1280, %v1036, 0
    %v1496 = vsel %vm1280, %v1037, 0
    %v1499 = vsel %vm1280, %v1038, 0
    %v1502 = vsel %vm1280, %v1039, 0
    %v1505 = vsel %vm1280, %v1040, 0
    %v1508 = vsel %vm1280, %v1041, 0
    %v1511 = vsel %vm1280, %v1042, 0
    %v1514 = vsel %vm1280, %v1043, 0
    %v1517 = vsel %vm1280, %v1044, 0
    %v1520 = vsel %vm1280, %v1045, 0
    %1522 = vmatprep.subr.mxu0 0.0
    %1523 = vmatpush1.msra.mxu0 %v1046
    %1524 = vmatprep.subr.mxu0 0.0
    %1525 = vmatpush1.msra.mxu0 %v1047
    %1526 = vmatprep.subr.mxu0 0.0
    %1527 = vmatpush1.msra.mxu0 %v1048
    %1528 = vmatprep.subr.mxu0 0.0
    %1529 = vmatpush1.msra.mxu0 %v1049
    %1530 = vmatprep.subr.mxu0 0.0
    %1531 = vmatpush1.msra.mxu0 %v1050
    %1532 = vmatprep.subr.mxu0 0.0
    %1533 = vmatpush1.msra.mxu0 %v1051
    %1534 = vmatprep.subr.mxu0 0.0
    %1535 = vmatpush1.msra.mxu0 %v1052
    %1536 = vmatprep.subr.mxu0 0.0
    %1537 = vmatpush1.msra.mxu0 %v1053
    %1538 = vmatprep.subr.mxu0 0.0
    %1539 = vmatpush1.msra.mxu0 %v1054
    %1540 = vmatprep.subr.mxu0 0.0
    %1541 = vmatpush1.msra.mxu0 %v1055
    %1542 = vmatprep.subr.mxu0 0.0
    %1543 = vmatpush1.msra.mxu0 %v1056
    %1544 = vmatprep.subr.mxu0 0.0
    %1545 = vmatpush1.msra.mxu0 %v1057
    %1546 = vmatprep.subr.mxu0 0.0
    %1547 = vmatpush1.msra.mxu0 0.0
    %1548 = vmatprep.subr.mxu0 0.0
    %1549 = vmatpush1.msra.mxu0 0.0
    %1550 = vmatprep.subr.mxu0 0.0
    %1551 = vmatpush1.msra.mxu0 0.0
    %1552 = vmatprep.subr.mxu0 0.0
    %1553 = vmatpush1.msra.mxu0 0.0
    %1554 = vmatprep.subr.mxu0 0.0
    %1555 = vmatpush1.msra.mxu0 0.0
    %1556 = vmatprep.subr.mxu0 0.0
    %1557 = vmatpush1.msra.mxu0 0.0
    %1558 = vmatprep.subr.mxu0 0.0
    %1559 = vmatpush1.msra.mxu0 0.0
    %1560 = vmatprep.subr.mxu0 0.0
    %1561 = vmatpush1.msra.mxu0 0.0
    %1562 = vmatprep.subr.mxu0 0.0
    %1563 = vmatpush1.msra.mxu0 0.0
    %1564 = vmatprep.subr.mxu0 0.0
    %1565 = vmatpush1.msra.mxu0 0.0
    %1566 = vmatprep.subr.mxu0 0.0
    %1567 = vmatpush1.msra.mxu0 0.0
    %1568 = vmatprep.subr.mxu0 0.0
    %1569 = vmatpush1.msra.mxu0 0.0
    %1570 = vmatprep.subr.mxu0 0.0
    %1571 = vmatpush1.msra.mxu0 0.0
    %1572 = vmatprep.subr.mxu0 0.0
    %1573 = vmatpush1.msra.mxu0 0.0
    %1574 = vmatprep.subr.mxu0 0.0
    %1575 = vmatpush1.msra.mxu0 0.0
    %1576 = vmatprep.subr.mxu0 0.0
    %1577 = vmatpush1.msra.mxu0 0.0
    %1578 = vmatprep.subr.mxu0 0.0
    %1579 = vmatpush1.msra.mxu0 0.0
    %1580 = vmatprep.subr.mxu0 0.0
    %1581 = vmatpush1.msra.mxu0 0.0
    %1582 = vmatprep.subr.mxu0 0.0
    %1583 = vmatpush1.msra.mxu0 0.0
    %1584 = vmatprep.subr.mxu0 0.0
    %1585 = vmatpush1.msra.mxu0 0.0
    %1586 = vmatprep.mubr.f32.mxu0 0.0
    %1587 = vmatmul.mubr.f32.gmra.mrb[0].mxu0 %v1475
    %v1588 = vpop.f32.mrb[0].mxu0
    %v1589 = vadd.f32 %v1396, %v1588
    %v1590 = vpop.f32.mrb[0].mxu0
    %1591 = vmatprep.mubr.f32.mxu0 0.0
    %1592 = vmatmul.mubr.f32.gmra.mrb[0].mxu0 %v1478
    %v1593 = vpop.f32.mrb[0].mxu0
    %v1594 = vadd.f32 %v1401, %v1593
    %v1595 = vpop.f32.mrb[0].mxu0
    %1596 = vmatprep.mubr.f32.mxu0 0.0
    %1597 = vmatmul.mubr.f32.gmra.mrb[0].mxu0 %v1481
    %v1598 = vpop.f32.mrb[0].mxu0
    %v1599 = vadd.f32 %v1406, %v1598
    %v1600 = vpop.f32.mrb[0].mxu0
    %1601 = vmatprep.mubr.f32.mxu0 0.0
    %1602 = vmatmul.mubr.f32.gmra.mrb[0].mxu0 %v1484
    %v1603 = vpop.f32.mrb[0].mxu0
    %v1604 = vadd.f32 %v1411, %v1603
    %v1605 = vpop.f32.mrb[0].mxu0
    %1606 = vmatprep.mubr.f32.mxu0 0.0
    %1607 = vmatmul.mubr.f32.gmra.mrb[0].mxu0 %v1487
    %v1608 = vpop.f32.mrb[0].mxu0
    %v1609 = vadd.f32 %v1416, %v1608
    %v1610 = vpop.f32.mrb[0].mxu0
    %1611 = vmatprep.mubr.f32.mxu0 0.0
    %1612 = vmatmul.mubr.f32.gmra.mrb[0].mxu0 %v1490
    %v1613 = vpop.f32.mrb[0].mxu0
    %v1614 = vadd.f32 %v1421, %v1613
    %v1615 = vpop.f32.mrb[0].mxu0
    %1616 = vmatprep.mubr.f32.mxu0 0.0
    %1617 = vmatmul.mubr.f32.gmra.mrb[0].mxu0 %v1493
    %v1618 = vpop.f32.mrb[0].mxu0
    %v1619 = vadd.f32 %v1426, %v1618
    %v1620 = vpop.f32.mrb[0].mxu0
    %1621 = vmatprep.mubr.f32.mxu0 0.0
    %1622 = vmatmul.mubr.f32.gmra.mrb[0].mxu0 %v1496
    %v1623 = vpop.f32.mrb[0].mxu0
    %v1624 = vadd.f32 %v1431, %v1623
    %v1625 = vpop.f32.mrb[0].mxu0
    %1626 = vmatprep.mubr.f32.mxu0 0.0
    %1627 = vmatmul.mubr.f32.gmra.mrb[0].mxu0 %v1499
    %v1628 = vpop.f32.mrb[0].mxu0
    %v1629 = vadd.f32 %v1436, %v1628
    %v1630 = vpop.f32.mrb[0].mxu0
    %1631 = vmatprep.mubr.f32.mxu0 0.0
    %1632 = vmatmul.mubr.f32.gmra.mrb[0].mxu0 %v1502
    %v1633 = vpop.f32.mrb[0].mxu0
    %v1634 = vadd.f32 %v1441, %v1633
    %v1635 = vpop.f32.mrb[0].mxu0
    %1636 = vmatprep.mubr.f32.mxu0 0.0
    %1637 = vmatmul.mubr.f32.gmra.mrb[0].mxu0 %v1505
    %v1638 = vpop.f32.mrb[0].mxu0
    %v1639 = vadd.f32 %v1446, %v1638
    %v1640 = vpop.f32.mrb[0].mxu0
    %1641 = vmatprep.mubr.f32.mxu0 0.0
    %1642 = vmatmul.mubr.f32.gmra.mrb[0].mxu0 %v1508
    %v1643 = vpop.f32.mrb[0].mxu0
    %v1644 = vadd.f32 %v1451, %v1643
    %v1645 = vpop.f32.mrb[0].mxu0
    %1646 = vmatprep.mubr.f32.mxu0 0.0
    %1647 = vmatmul.mubr.f32.gmra.mrb[0].mxu0 %v1511
    %v1648 = vpop.f32.mrb[0].mxu0
    %v1649 = vadd.f32 %v1456, %v1648
    %v1650 = vpop.f32.mrb[0].mxu0
    %1651 = vmatprep.mubr.f32.mxu0 0.0
    %1652 = vmatmul.mubr.f32.gmra.mrb[0].mxu0 %v1514
    %v1653 = vpop.f32.mrb[0].mxu0
    %v1654 = vadd.f32 %v1461, %v1653
    %v1655 = vpop.f32.mrb[0].mxu0
    %1656 = vmatprep.mubr.f32.mxu0 0.0
    %1657 = vmatmul.mubr.f32.gmra.mrb[0].mxu0 %v1517
    %v1658 = vpop.f32.mrb[0].mxu0
    %v1659 = vadd.f32 %v1466, %v1658
    %v1660 = vpop.f32.mrb[0].mxu0
    %1661 = vmatprep.mubr.f32.mxu0 0.0
    %1662 = vmatmul.mubr.f32.gmra.mrb[0].mxu0 %v1520
    %v1663 = vpop.f32.mrb[0].mxu0
    %v1664 = vadd.f32 %v1471, %v1663
    %v1665 = vpop.f32.mrb[0].mxu0
    %1666 = vdwg.mxu0
    %s1667 = scalar_lea.vmem [#allocation2], 32
    %v1668 = vld [vmem:[%s1667] sm:$0xff]
    %v1669 = vld [vmem:[%s1667 + $0x10] sm:$0xff]
    %v1670 = vld [vmem:[%s1667 + $0x20] sm:$0xff]
    %v1671 = vld [vmem:[%s1667 + $0x30] sm:$0xff]
    %v1672 = vld [vmem:[%s1667 + $0x40] sm:$0xff]
    %v1673 = vld [vmem:[%s1667 + $0x50] sm:$0xff]
    %v1674 = vld [vmem:[%s1667 + $0x60] sm:$0xff]
    %v1675 = vld [vmem:[%s1667 + $0x70] sm:$0xff]
    %v1676 = vld [vmem:[%s1667 + $0xa0] sm:$0xff]
    %v1677 = vld [vmem:[%s1667 + $0xb0] sm:$0xff]
    %v1678 = vld [vmem:[%s1667 + $0xc0] sm:$0xff]
    %v1679 = vld [vmem:[%s1667 + $0xd0] sm:$0xff]
    %v1680 = vld [vmem:[%s1667 + $0xe0] sm:$0xff]
    %v1681 = vld [vmem:[%s1667 + $0xf0] sm:$0xff]
    %v1682 = vld [vmem:[%s1667 + $0x100] sm:$0xff]
    %v1683 = vld [vmem:[%s1667 + $0x110] sm:$0xff]
    %v1684 = vld [vmem:[%s1667 + $0x1] sm:$0xff]
    %v1685 = vld [vmem:[%s1667 + $0x11] sm:$0xff]
    %v1686 = vld [vmem:[%s1667 + $0x21] sm:$0xff]
    %v1687 = vld [vmem:[%s1667 + $0x31] sm:$0xff]
    %v1688 = vld [vmem:[%s1667 + $0x41] sm:$0xff]
    %v1689 = vld [vmem:[%s1667 + $0x51] sm:$0xff]
    %v1690 = vld [vmem:[%s1667 + $0x61] sm:$0xff]
    %v1691 = vld [vmem:[%s1667 + $0x71] sm:$0xff]
    %v1692 = vld [vmem:[%s1667 + $0xa1] sm:$0xff]
    %v1693 = vld [vmem:[%s1667 + $0xb1] sm:$0xff]
    %v1694 = vld [vmem:[%s1667 + $0xc1] sm:$0xff]
    %v1695 = vld [vmem:[%s1667 + $0xd1] sm:$0xff]
    %v1696 = vld [vmem:[%s1667 + $0xe1] sm:$0xff]
    %v1697 = vld [vmem:[%s1667 + $0xf1] sm:$0xff]
    %v1698 = vld [vmem:[%s1667 + $0x101] sm:$0xff]
    %v1699 = vld [vmem:[%s1667 + $0x111] sm:$0xff]
    %v1700 = vld [vmem:[%s1667 + $0x2] sm:$0xff]
    %v1701 = vld [vmem:[%s1667 + $0x12] sm:$0xff]
    %v1702 = vld [vmem:[%s1667 + $0x22] sm:$0xff]
    %v1703 = vld [vmem:[%s1667 + $0x32] sm:$0xff]
    %v1704 = vld [vmem:[%s1667 + $0x42] sm:$0xff]
    %v1705 = vld [vmem:[%s1667 + $0x52] sm:$0xff]
    %v1706 = vld [vmem:[%s1667 + $0x62] sm:$0xff]
    %v1707 = vld [vmem:[%s1667 + $0x72] sm:$0xff]
    %v1708 = vld [vmem:[%s1667 + $0xa2] sm:$0xff]
    %v1709 = vld [vmem:[%s1667 + $0xb2] sm:$0xff]
    %v1710 = vld [vmem:[%s1667 + $0xc2] sm:$0xff]
    %v1711 = vld [vmem:[%s1667 + $0xd2] sm:$0xff]
    %v1712 = vld [vmem:[%s1667 + $0xe2] sm:$0xff]
    %v1713 = vld [vmem:[%s1667 + $0xf2] sm:$0xff]
    %v1714 = vld [vmem:[%s1667 + $0x102] sm:$0xff]
    %v1715 = vld [vmem:[%s1667 + $0x112] sm:$0xff]
    %1732 = vrot.lane.b32.xlu0 %v1684, 32
    %v1733 = vpop.permute.xlu0 %1732
    %1734 = vrot.lane.b32.xlu0 %v1685, 32
    %v1735 = vpop.permute.xlu0 %1734
    %1736 = vrot.lane.b32.xlu0 %v1686, 32
    %v1737 = vpop.permute.xlu0 %1736
    %1738 = vrot.lane.b32.xlu0 %v1687, 32
    %v1739 = vpop.permute.xlu0 %1738
    %1740 = vrot.lane.b32.xlu0 %v1688, 32
    %v1741 = vpop.permute.xlu0 %1740
    %1742 = vrot.lane.b32.xlu0 %v1689, 32
    %v1743 = vpop.permute.xlu0 %1742
    %1744 = vrot.lane.b32.xlu0 %v1690, 32
    %v1745 = vpop.permute.xlu0 %1744
    %1746 = vrot.lane.b32.xlu0 %v1691, 32
    %v1747 = vpop.permute.xlu0 %1746
    %1748 = vrot.lane.b32.xlu0 %v1692, 32
    %v1749 = vpop.permute.xlu0 %1748
    %1750 = vrot.lane.b32.xlu0 %v1693, 32
    %v1751 = vpop.permute.xlu0 %1750
    %1752 = vrot.lane.b32.xlu0 %v1694, 32
    %v1753 = vpop.permute.xlu0 %1752
    %1754 = vrot.lane.b32.xlu0 %v1695, 32
    %v1755 = vpop.permute.xlu0 %1754
    %1756 = vrot.lane.b32.xlu0 %v1696, 32
    %v1757 = vpop.permute.xlu0 %1756
    %1758 = vrot.lane.b32.xlu0 %v1697, 32
    %v1759 = vpop.permute.xlu0 %1758
    %1760 = vrot.lane.b32.xlu0 %v1698, 32
    %v1761 = vpop.permute.xlu0 %1760
    %1762 = vrot.lane.b32.xlu0 %v1699, 32
    %v1763 = vpop.permute.xlu0 %1762
    %1796 = vrot.lane.b32.xlu0 %v1700, 64
    %v1797 = vpop.permute.xlu0 %1796
    %1798 = vrot.lane.b32.xlu0 %v1701, 64
    %v1799 = vpop.permute.xlu0 %1798
    %1800 = vrot.lane.b32.xlu0 %v1702, 64
    %v1801 = vpop.permute.xlu0 %1800
    %1802 = vrot.lane.b32.xlu0 %v1703, 64
    %v1803 = vpop.permute.xlu0 %1802
    %1804 = vrot.lane.b32.xlu0 %v1704, 64
    %v1805 = vpop.permute.xlu0 %1804
    %1806 = vrot.lane.b32.xlu0 %v1705, 64
    %v1807 = vpop.permute.xlu0 %1806
    %1808 = vrot.lane.b32.xlu0 %v1706, 64
    %v1809 = vpop.permute.xlu0 %1808
    %1810 = vrot.lane.b32.xlu0 %v1707, 64
    %v1811 = vpop.permute.xlu0 %1810
    %1812 = vrot.lane.b32.xlu0 %v1708, 64
    %v1813 = vpop.permute.xlu0 %1812
    %1814 = vrot.lane.b32.xlu0 %v1709, 64
    %v1815 = vpop.permute.xlu0 %1814
    %1816 = vrot.lane.b32.xlu0 %v1710, 64
    %v1817 = vpop.permute.xlu0 %1816
    %1818 = vrot.lane.b32.xlu0 %v1711, 64
    %v1819 = vpop.permute.xlu0 %1818
    %1820 = vrot.lane.b32.xlu0 %v1712, 64
    %v1821 = vpop.permute.xlu0 %1820
    %1822 = vrot.lane.b32.xlu0 %v1713, 64
    %v1823 = vpop.permute.xlu0 %1822
    %1824 = vrot.lane.b32.xlu0 %v1714, 64
    %v1825 = vpop.permute.xlu0 %1824
    %1826 = vrot.lane.b32.xlu0 %v1715, 64
    %v1827 = vpop.permute.xlu0 %1826
    %v1844 = vsel %vm62, %v1668, %v1733
    %v1845 = vsel %vm62, %v1669, %v1735
    %v1846 = vsel %vm62, %v1670, %v1737
    %v1847 = vsel %vm62, %v1671, %v1739
    %v1848 = vsel %vm62, %v1672, %v1741
    %v1849 = vsel %vm62, %v1673, %v1743
    %v1850 = vsel %vm62, %v1674, %v1745
    %v1851 = vsel %vm62, %v1675, %v1747
    %v1852 = vsel %vm62, %v1676, %v1749
    %v1853 = vsel %vm62, %v1677, %v1751
    %v1854 = vsel %vm62, %v1678, %v1753
    %v1855 = vsel %vm62, %v1679, %v1755
    %v1856 = vsel %vm62, %v1680, %v1757
    %v1857 = vsel %vm62, %v1681, %v1759
    %v1858 = vsel %vm62, %v1682, %v1761
    %v1859 = vsel %vm62, %v1683, %v1763
    %v1860 = vsel %vm1029, %v1844, %v1797
    %v1861 = vsel %vm1029, %v1845, %v1799
    %v1862 = vsel %vm1029, %v1846, %v1801
    %v1863 = vsel %vm1029, %v1847, %v1803
    %v1864 = vsel %vm1029, %v1848, %v1805
    %v1865 = vsel %vm1029, %v1849, %v1807
    %v1866 = vsel %vm1029, %v1850, %v1809
    %v1867 = vsel %vm1029, %v1851, %v1811
    %v1868 = vsel %vm1029, %v1852, %v1813
    %v1869 = vsel %vm1029, %v1853, %v1815
    %v1870 = vsel %vm1029, %v1854, %v1817
    %v1871 = vsel %vm1029, %v1855, %v1819
    %v1872 = vsel %vm1029, %v1856, %v1821
    %v1873 = vsel %vm1029, %v1857, %v1823
    %v1874 = vsel %vm1029, %v1858, %v1825
    %v1875 = vsel %vm1029, %v1859, %v1827
    %s1876 = scalar_lea.vmem %s2, 192
    %v1877 = vld [vmem:[%s1876] sm:$0xff]
    %v1878 = vld [vmem:[%s1876 + $0x8] sm:$0xff]
    %v1879 = vld [vmem:[%s1876 + $0x10] sm:$0xff]
    %v1880 = vld [vmem:[%s1876 + $0x18] sm:$0xff]
    %v1881 = vld [vmem:[%s1876 + $0x20] sm:$0xff]
    %v1882 = vld [vmem:[%s1876 + $0x28] sm:$0xff]
    %v1883 = vld [vmem:[%s1876 + $0x30] sm:$0xff]
    %v1884 = vld [vmem:[%s1876 + $0x38] sm:$0xff]
    %v1885 = vld [vmem:[%s1876 + $0x40] sm:$0xff]
    %v1886 = vld [vmem:[%s1876 + $0x48] sm:$0xff]
    %v1887 = vld [vmem:[%s1876 + $0x50] sm:$0xff]
    %v1888 = vld [vmem:[%s1876 + $0x58] sm:$0xff]
    %v1890 = vsel %vm1280, %v1860, 0
    %v1893 = vsel %vm1280, %v1861, 0
    %v1896 = vsel %vm1280, %v1862, 0
    %v1899 = vsel %vm1280, %v1863, 0
    %v1902 = vsel %vm1280, %v1864, 0
    %v1905 = vsel %vm1280, %v1865, 0
    %v1908 = vsel %vm1280, %v1866, 0
    %v1911 = vsel %vm1280, %v1867, 0
    %v1914 = vsel %vm1280, %v1868, 0
    %v1917 = vsel %vm1280, %v1869, 0
    %v1920 = vsel %vm1280, %v1870, 0
    %v1923 = vsel %vm1280, %v1871, 0
    %v1926 = vsel %vm1280, %v1872, 0
    %v1929 = vsel %vm1280, %v1873, 0
    %v1932 = vsel %vm1280, %v1874, 0
    %v1935 = vsel %vm1280, %v1875, 0
    %1937 = vmatprep.subr.mxu0 0.0
    %1938 = vmatpush1.msra.mxu0 %v1877
    %1939 = vmatprep.subr.mxu0 0.0
    %1940 = vmatpush1.msra.mxu0 %v1878
    %1941 = vmatprep.subr.mxu0 0.0
    %1942 = vmatpush1.msra.mxu0 %v1879
    %1943 = vmatprep.subr.mxu0 0.0
    %1944 = vmatpush1.msra.mxu0 %v1880
    %1945 = vmatprep.subr.mxu0 0.0
    %1946 = vmatpush1.msra.mxu0 %v1881
    %1947 = vmatprep.subr.mxu0 0.0
    %1948 = vmatpush1.msra.mxu0 %v1882
    %1949 = vmatprep.subr.mxu0 0.0
    %1950 = vmatpush1.msra.mxu0 %v1883
    %1951 = vmatprep.subr.mxu0 0.0
    %1952 = vmatpush1.msra.mxu0 %v1884
    %1953 = vmatprep.subr.mxu0 0.0
    %1954 = vmatpush1.msra.mxu0 %v1885
    %1955 = vmatprep.subr.mxu0 0.0
    %1956 = vmatpush1.msra.mxu0 %v1886
    %1957 = vmatprep.subr.mxu0 0.0
    %1958 = vmatpush1.msra.mxu0 %v1887
    %1959 = vmatprep.subr.mxu0 0.0
    %1960 = vmatpush1.msra.mxu0 %v1888
    %1961 = vmatprep.subr.mxu0 0.0
    %1962 = vmatpush1.msra.mxu0 0.0
    %1963 = vmatprep.subr.mxu0 0.0
    %1964 = vmatpush1.msra.mxu0 0.0
    %1965 = vmatprep.subr.mxu0 0.0
    %1966 = vmatpush1.msra.mxu0 0.0
    %1967 = vmatprep.subr.mxu0 0.0
    %1968 = vmatpush1.msra.mxu0 0.0
    %1969 = vmatprep.subr.mxu0 0.0
    %1970 = vmatpush1.msra.mxu0 0.0
    %1971 = vmatprep.subr.mxu0 0.0
    %1972 = vmatpush1.msra.mxu0 0.0
    %1973 = vmatprep.subr.mxu0 0.0
    %1974 = vmatpush1.msra.mxu0 0.0
    %1975 = vmatprep.subr.mxu0 0.0
    %1976 = vmatpush1.msra.mxu0 0.0
    %1977 = vmatprep.subr.mxu0 0.0
    %1978 = vmatpush1.msra.mxu0 0.0
    %1979 = vmatprep.subr.mxu0 0.0
    %1980 = vmatpush1.msra.mxu0 0.0
    %1981 = vmatprep.subr.mxu0 0.0
    %1982 = vmatpush1.msra.mxu0 0.0
    %1983 = vmatprep.subr.mxu0 0.0
    %1984 = vmatpush1.msra.mxu0 0.0
    %1985 = vmatprep.subr.mxu0 0.0
    %1986 = vmatpush1.msra.mxu0 0.0
    %1987 = vmatprep.subr.mxu0 0.0
    %1988 = vmatpush1.msra.mxu0 0.0
    %1989 = vmatprep.subr.mxu0 0.0
    %1990 = vmatpush1.msra.mxu0 0.0
    %1991 = vmatprep.subr.mxu0 0.0
    %1992 = vmatpush1.msra.mxu0 0.0
    %1993 = vmatprep.subr.mxu0 0.0
    %1994 = vmatpush1.msra.mxu0 0.0
    %1995 = vmatprep.subr.mxu0 0.0
    %1996 = vmatpush1.msra.mxu0 0.0
    %1997 = vmatprep.subr.mxu0 0.0
    %1998 = vmatpush1.msra.mxu0 0.0
    %1999 = vmatprep.subr.mxu0 0.0
    %2000 = vmatpush1.msra.mxu0 0.0
    %2001 = vmatprep.mubr.f32.mxu0 0.0
    %2002 = vmatmul.mubr.f32.gmra.mrb[0].mxu0 %v1890
    %v2003 = vpop.f32.mrb[0].mxu0
    %v2004 = vadd.f32 0.0, %v2003
    %v2005 = vpop.f32.mrb[0].mxu0
    %2006 = vmatprep.mubr.f32.mxu0 0.0
    %2007 = vmatmul.mubr.f32.gmra.mrb[0].mxu0 %v1893
    %v2008 = vpop.f32.mrb[0].mxu0
    %v2009 = vadd.f32 0.0, %v2008
    %v2010 = vpop.f32.mrb[0].mxu0
    %2011 = vmatprep.mubr.f32.mxu0 0.0
    %2012 = vmatmul.mubr.f32.gmra.mrb[0].mxu0 %v1896
    %v2013 = vpop.f32.mrb[0].mxu0
    %v2014 = vadd.f32 0.0, %v2013
    %v2015 = vpop.f32.mrb[0].mxu0
    %2016 = vmatprep.mubr.f32.mxu0 0.0
    %2017 = vmatmul.mubr.f32.gmra.mrb[0].mxu0 %v1899
    %v2018 = vpop.f32.mrb[0].mxu0
    %v2019 = vadd.f32 0.0, %v2018
    %v2020 = vpop.f32.mrb[0].mxu0
    %2021 = vmatprep.mubr.f32.mxu0 0.0
    %2022 = vmatmul.mubr.f32.gmra.mrb[0].mxu0 %v1902
    %v2023 = vpop.f32.mrb[0].mxu0
    %v2024 = vadd.f32 0.0, %v2023
    %v2025 = vpop.f32.mrb[0].mxu0
    %2026 = vmatprep.mubr.f32.mxu0 0.0
    %2027 = vmatmul.mubr.f32.gmra.mrb[0].mxu0 %v1905
    %v2028 = vpop.f32.mrb[0].mxu0
    %v2029 = vadd.f32 0.0, %v2028
    %v2030 = vpop.f32.mrb[0].mxu0
    %2031 = vmatprep.mubr.f32.mxu0 0.0
    %2032 = vmatmul.mubr.f32.gmra.mrb[0].mxu0 %v1908
    %v2033 = vpop.f32.mrb[0].mxu0
    %v2034 = vadd.f32 0.0, %v2033
    %v2035 = vpop.f32.mrb[0].mxu0
    %2036 = vmatprep.mubr.f32.mxu0 0.0
    %2037 = vmatmul.mubr.f32.gmra.mrb[0].mxu0 %v1911
    %v2038 = vpop.f32.mrb[0].mxu0
    %v2039 = vadd.f32 0.0, %v2038
    %v2040 = vpop.f32.mrb[0].mxu0
    %2041 = vmatprep.mubr.f32.mxu0 0.0
    %2042 = vmatmul.mubr.f32.gmra.mrb[0].mxu0 %v1914
    %v2043 = vpop.f32.mrb[0].mxu0
    %v2044 = vadd.f32 0.0, %v2043
    %v2045 = vpop.f32.mrb[0].mxu0
    %2046 = vmatprep.mubr.f32.mxu0 0.0
    %2047 = vmatmul.mubr.f32.gmra.mrb[0].mxu0 %v1917
    %v2048 = vpop.f32.mrb[0].mxu0
    %v2049 = vadd.f32 0.0, %v2048
    %v2050 = vpop.f32.mrb[0].mxu0
    %2051 = vmatprep.mubr.f32.mxu0 0.0
    %2052 = vmatmul.mubr.f32.gmra.mrb[0].mxu0 %v1920
    %v2053 = vpop.f32.mrb[0].mxu0
    %v2054 = vadd.f32 0.0, %v2053
    %v2055 = vpop.f32.mrb[0].mxu0
    %2056 = vmatprep.mubr.f32.mxu0 0.0
    %2057 = vmatmul.mubr.f32.gmra.mrb[0].mxu0 %v1923
    %v2058 = vpop.f32.mrb[0].mxu0
    %v2059 = vadd.f32 0.0, %v2058
    %v2060 = vpop.f32.mrb[0].mxu0
    %2061 = vmatprep.mubr.f32.mxu0 0.0
    %2062 = vmatmul.mubr.f32.gmra.mrb[0].mxu0 %v1926
    %v2063 = vpop.f32.mrb[0].mxu0
    %v2064 = vadd.f32 0.0, %v2063
    %v2065 = vpop.f32.mrb[0].mxu0
    %2066 = vmatprep.mubr.f32.mxu0 0.0
    %2067 = vmatmul.mubr.f32.gmra.mrb[0].mxu0 %v1929
    %v2068 = vpop.f32.mrb[0].mxu0
    %v2069 = vadd.f32 0.0, %v2068
    %v2070 = vpop.f32.mrb[0].mxu0
    %2071 = vmatprep.mubr.f32.mxu0 0.0
    %2072 = vmatmul.mubr.f32.gmra.mrb[0].mxu0 %v1932
    %v2073 = vpop.f32.mrb[0].mxu0
    %v2074 = vadd.f32 0.0, %v2073
    %v2075 = vpop.f32.mrb[0].mxu0
    %2076 = vmatprep.mubr.f32.mxu0 0.0
    %2077 = vmatmul.mubr.f32.gmra.mrb[0].mxu0 %v1935
    %v2078 = vpop.f32.mrb[0].mxu0
    %v2079 = vadd.f32 0.0, %v2078
    %v2080 = vpop.f32.mrb[0].mxu0
    %2081 = vdwg.mxu0
    %v2082 = vadd.f32 %v1589, %v2004
    %v2083 = vadd.f32 %v1594, %v2009
    %v2084 = vadd.f32 %v1599, %v2014
    %v2085 = vadd.f32 %v1604, %v2019
    %v2086 = vadd.f32 %v1609, %v2024
    %v2087 = vadd.f32 %v1614, %v2029
    %v2088 = vadd.f32 %v1619, %v2034
    %v2089 = vadd.f32 %v1624, %v2039
    %v2090 = vadd.f32 %v1629, %v2044
    %v2091 = vadd.f32 %v1634, %v2049
    %v2092 = vadd.f32 %v1639, %v2054
    %v2093 = vadd.f32 %v1644, %v2059
    %v2094 = vadd.f32 %v1649, %v2064
    %v2095 = vadd.f32 %v1654, %v2069
    %v2096 = vadd.f32 %v1659, %v2074
    %v2097 = vadd.f32 %v1664, %v2079
    %v2098 = vsel %vm62, %v2082, 0.0
    %v2099 = vsel %vm62, %v2083, 0.0
    %v2100 = vadd.f32 %v2098, %v2099
    %v2101 = vsel %vm62, %v2084, 0.0
    %v2102 = vadd.f32 %v2100, %v2101
    %v2103 = vsel %vm62, %v2085, 0.0
    %v2104 = vadd.f32 %v2102, %v2103
    %v2105 = vsel %vm62, %v2086, 0.0
    %v2106 = vadd.f32 %v2104, %v2105
    %v2107 = vsel %vm62, %v2087, 0.0
    %v2108 = vadd.f32 %v2106, %v2107
    %v2109 = vsel %vm62, %v2088, 0.0
    %v2110 = vadd.f32 %v2108, %v2109
    %v2111 = vsel %vm62, %v2089, 0.0
    %v2112 = vadd.f32 %v2110, %v2111
    %v2113 = vsel %vm62, %v2090, 0.0
    %v2114 = vadd.f32 %v2112, %v2113
    %v2115 = vsel %vm62, %v2091, 0.0
    %v2116 = vadd.f32 %v2114, %v2115
    %v2117 = vsel %vm62, %v2092, 0.0
    %v2118 = vadd.f32 %v2116, %v2117
    %v2119 = vsel %vm62, %v2093, 0.0
    %v2120 = vadd.f32 %v2118, %v2119
    %v2121 = vsel %vm62, %v2094, 0.0
    %v2122 = vadd.f32 %v2120, %v2121
    %v2123 = vsel %vm62, %v2095, 0.0
    %v2124 = vadd.f32 %v2122, %v2123
    %v2125 = vsel %vm62, %v2096, 0.0
    %v2126 = vadd.f32 %v2124, %v2125
    %v2127 = vsel %vm62, %v2097, 0.0
    %v2128 = vadd.f32 %v2126, %v2127
    %v2129 = vrot.slane %v2128, 4
    %v2130 = vadd.f32 %v2128, %v2129
    %v2131 = vrot.slane %v2130, 2
    %v2132 = vadd.f32 %v2130, %v2131
    %v2133 = vrot.slane %v2132, 1
    %v2134 = vadd.f32 %v2132, %v2133
    %v2135 = vmul.f32 %v2134, 0.0078125
    %v2136 = vmul.f32 %v2082, %v2082
    %v2137 = vmul.f32 %v2083, %v2083
    %v2138 = vmul.f32 %v2084, %v2084
    %v2139 = vmul.f32 %v2085, %v2085
    %v2140 = vmul.f32 %v2086, %v2086
    %v2141 = vmul.f32 %v2087, %v2087
    %v2142 = vmul.f32 %v2088, %v2088
    %v2143 = vmul.f32 %v2089, %v2089
    %v2144 = vmul.f32 %v2090, %v2090
    %v2145 = vmul.f32 %v2091, %v2091
    %v2146 = vmul.f32 %v2092, %v2092
    %v2147 = vmul.f32 %v2093, %v2093
    %v2148 = vmul.f32 %v2094, %v2094
    %v2149 = vmul.f32 %v2095, %v2095
    %v2150 = vmul.f32 %v2096, %v2096
    %v2151 = vmul.f32 %v2097, %v2097
    %v2152 = vsel %vm62, %v2136, 0.0
    %v2153 = vsel %vm62, %v2137, 0.0
    %v2154 = vadd.f32 %v2152, %v2153
    %v2155 = vsel %vm62, %v2138, 0.0
    %v2156 = vadd.f32 %v2154, %v2155
    %v2157 = vsel %vm62, %v2139, 0.0
    %v2158 = vadd.f32 %v2156, %v2157
    %v2159 = vsel %vm62, %v2140, 0.0
    %v2160 = vadd.f32 %v2158, %v2159
    %v2161 = vsel %vm62, %v2141, 0.0
    %v2162 = vadd.f32 %v2160, %v2161
    %v2163 = vsel %vm62, %v2142, 0.0
    %v2164 = vadd.f32 %v2162, %v2163
    %v2165 = vsel %vm62, %v2143, 0.0
    %v2166 = vadd.f32 %v2164, %v2165
    %v2167 = vsel %vm62, %v2144, 0.0
    %v2168 = vadd.f32 %v2166, %v2167
    %v2169 = vsel %vm62, %v2145, 0.0
    %v2170 = vadd.f32 %v2168, %v2169
    %v2171 = vsel %vm62, %v2146, 0.0
    %v2172 = vadd.f32 %v2170, %v2171
    %v2173 = vsel %vm62, %v2147, 0.0
    %v2174 = vadd.f32 %v2172, %v2173
    %v2175 = vsel %vm62, %v2148, 0.0
    %v2176 = vadd.f32 %v2174, %v2175
    %v2177 = vsel %vm62, %v2149, 0.0
    %v2178 = vadd.f32 %v2176, %v2177
    %v2179 = vsel %vm62, %v2150, 0.0
    %v2180 = vadd.f32 %v2178, %v2179
    %v2181 = vsel %vm62, %v2151, 0.0
    %v2182 = vadd.f32 %v2180, %v2181
    %v2183 = vrot.slane %v2182, 4
    %v2184 = vadd.f32 %v2182, %v2183
    %v2185 = vrot.slane %v2184, 2
    %v2186 = vadd.f32 %v2184, %v2185
    %v2187 = vrot.slane %v2186, 1
    %v2188 = vadd.f32 %v2186, %v2187
    %v2189 = vmul.f32 %v2188, 0.0078125
    %v2190 = vmul.f32 %v2135, %v2135
    %v2191 = vsub.f32 %v2189, %v2190
    %v2192 = vld [vmem:[%s3 + $0x2] sm:$0x1]
    %v2193 = vadd.f32 %v2191, 1e-05
    %v2194 = vrsqrt.pop %v2193
    %v2195 = vmul.f32 %v2192, %v2194
    %v2196 = vld [vmem:[%s3 + $0x3] sm:$0x1]
    %v2197 = vmul.f32 %v2135, %v2195
    %v2198 = vsub.f32 %v2196, %v2197
    %v2199 = vlaneseq
    %v2200 = vshrl.u32 %v2199, 7
    %v2201 = vsub.s32 0, %v2200
    %v2202 = vrot.slane %v2195, %v2201
    %v2203 = vmul.f32 %v2082, %v2202
    %v2204 = vmul.f32 %v2083, %v2202
    %v2205 = vmul.f32 %v2084, %v2202
    %v2206 = vmul.f32 %v2085, %v2202
    %v2207 = vmul.f32 %v2086, %v2202
    %v2208 = vmul.f32 %v2087, %v2202
    %v2209 = vmul.f32 %v2088, %v2202
    %v2210 = vmul.f32 %v2089, %v2202
    %v2211 = vmul.f32 %v2090, %v2202
    %v2212 = vmul.f32 %v2091, %v2202
    %v2213 = vmul.f32 %v2092, %v2202
    %v2214 = vmul.f32 %v2093, %v2202
    %v2215 = vmul.f32 %v2094, %v2202
    %v2216 = vmul.f32 %v2095, %v2202
    %v2217 = vmul.f32 %v2096, %v2202
    %v2218 = vmul.f32 %v2097, %v2202
    %v2219 = vlaneseq
    %v2220 = vshrl.u32 %v2219, 7
    %v2221 = vsub.s32 0, %v2220
    %v2222 = vrot.slane %v2198, %v2221
    %v2223 = vadd.f32 %v2203, %v2222
    %v2224 = vadd.f32 %v2204, %v2222
    %v2225 = vadd.f32 %v2205, %v2222
    %v2226 = vadd.f32 %v2206, %v2222
    %v2227 = vadd.f32 %v2207, %v2222
    %v2228 = vadd.f32 %v2208, %v2222
    %v2229 = vadd.f32 %v2209, %v2222
    %v2230 = vadd.f32 %v2210, %v2222
    %v2231 = vadd.f32 %v2211, %v2222
    %v2232 = vadd.f32 %v2212, %v2222
    %v2233 = vadd.f32 %v2213, %v2222
    %v2234 = vadd.f32 %v2214, %v2222
    %v2235 = vadd.f32 %v2215, %v2222
    %v2236 = vadd.f32 %v2216, %v2222
    %v2237 = vadd.f32 %v2217, %v2222
    %v2238 = vadd.f32 %v2218, %v2222
    %v2239 = vmax.f32 %v2223, 0.0
    %v2240 = vmax.f32 %v2224, 0.0
    %v2241 = vmax.f32 %v2225, 0.0
    %v2242 = vmax.f32 %v2226, 0.0
    %v2243 = vmax.f32 %v2227, 0.0
    %v2244 = vmax.f32 %v2228, 0.0
    %v2245 = vmax.f32 %v2229, 0.0
    %v2246 = vmax.f32 %v2230, 0.0
    %v2247 = vmax.f32 %v2231, 0.0
    %v2248 = vmax.f32 %v2232, 0.0
    %v2249 = vmax.f32 %v2233, 0.0
    %v2250 = vmax.f32 %v2234, 0.0
    %v2251 = vmax.f32 %v2235, 0.0
    %v2252 = vmax.f32 %v2236, 0.0
    %v2253 = vmax.f32 %v2237, 0.0
    %v2254 = vmax.f32 %v2238, 0.0
    %2255 = vst.msk [vmem:[#allocation3] sm:$0xff] %vm62, %v2239
    %2256 = vst.msk [vmem:[#allocation3 + $0x8] sm:$0xff] %vm62, %v2240
    %2257 = vst.msk [vmem:[#allocation3 + $0x10] sm:$0xff] %vm62, %v2241
    %2258 = vst.msk [vmem:[#allocation3 + $0x18] sm:$0xff] %vm62, %v2242
    %2259 = vst.msk [vmem:[#allocation3 + $0x20] sm:$0xff] %vm62, %v2243
    %2260 = vst.msk [vmem:[#allocation3 + $0x28] sm:$0xff] %vm62, %v2244
    %2261 = vst.msk [vmem:[#allocation3 + $0x30] sm:$0xff] %vm62, %v2245
    %2262 = vst.msk [vmem:[#allocation3 + $0x38] sm:$0xff] %vm62, %v2246
    %2263 = vst.msk [vmem:[#allocation3 + $0x40] sm:$0xff] %vm62, %v2247
    %2264 = vst.msk [vmem:[#allocation3 + $0x48] sm:$0xff] %vm62, %v2248
    %2265 = vst.msk [vmem:[#allocation3 + $0x50] sm:$0xff] %vm62, %v2249
    %2266 = vst.msk [vmem:[#allocation3 + $0x58] sm:$0xff] %vm62, %v2250
    %2267 = vst.msk [vmem:[#allocation3 + $0x60] sm:$0xff] %vm62, %v2251
    %2268 = vst.msk [vmem:[#allocation3 + $0x68] sm:$0xff] %vm62, %v2252
    %2269 = vst.msk [vmem:[#allocation3 + $0x70] sm:$0xff] %vm62, %v2253
    %2270 = vst.msk [vmem:[#allocation3 + $0x78] sm:$0xff] %vm62, %v2254
    // Predicated region
    $region18: #{image_encoder_forward.1} parent=1 // pred_check
      _
    $region19: #{image_encoder_forward.1} parent=1 // pred_check_branch
      %2272 = sbr.rel (0) target = $region21
    $region20: #{image_encoder_forward.1} parent=1 // pred_region
      %s2274 = ssub.s32 2048, 2048
      %2275 = vsyncadd [#allocation4], %s2274
      %s2276 = sshll.u32 [#allocation3], 4
      %s2277 = int_to_ptr.vmem [resolvable:$true] %s2276
      %2282 = dma.vmem_to_hbm [thread:$0]  %s2277, 2048, %s4, [#allocation4], 128, 128, 8
    $region21: #{image_encoder_forward.1} parent=1 // pred_fallthru
      _
    // Predicated region
    $region22: #{image_encoder_forward.1} parent=1 // pred_check
      _
    $region23: #{image_encoder_forward.1} parent=1 // pred_check_branch
      %2284 = sbr.rel (0) target = $region25
    $region24: #{image_encoder_forward.1} parent=1 // pred_region
      %2285 = dma.done [#allocation4], 2048
    $region25: #{image_encoder_forward.1} parent=1 // pred_fallthru
      _
    %2286 = vsyncpa [#allocation4], 1

</llo_original>
